<compile_context>
chip_gen: v5e
topology: v5e:2x2
jax: 0.10.0
libtpu: 0.0.40
codegen_flags: <defaults>
</compile_context>

<pallas_src>
import jax
import jax.numpy as jnp
from jax.experimental import pallas as pl
from jax.experimental.pallas import tpu as pltpu

# ----------------------------------------------------------------------------
# Model hyper-parameters (deterministic, baked in-script)
# ----------------------------------------------------------------------------
IN_DIM = 2381
K_PAD = 2432                      # 19 * 128, zero-padded K for fc1 (inside kernel)
ALPHA = 0.5
BETAS = (0.30, 0.25, 0.20, 0.35, 0.40, 0.15, 0.30, 0.25, 0.20, 0.30)

# specific_indices per act_on call (10 calls; feature dims 128,64,64,64,32,32,32,16,16,16)
SPECIFIC_INDICES = (
    tuple(range(0, 128, 7)),      # call 0, dim 128
    tuple(range(0, 64, 5)),       # call 1, dim 64
    tuple(range(1, 64, 9)),       # call 2, dim 64
    tuple(range(2, 64, 11)),      # call 3, dim 64
    tuple(range(0, 32, 3)),       # call 4, dim 32
    tuple(range(1, 32, 4)),       # call 5, dim 32
    tuple(range(2, 32, 6)),       # call 6, dim 32
    tuple(range(0, 16, 2)),       # call 7, dim 16
    tuple(range(1, 16, 3)),       # call 8, dim 16
    tuple(range(0, 16, 5)),       # call 9, dim 16
)
ACT_DIMS = (128, 64, 64, 64, 32, 32, 32, 16, 16, 16)

# Row layout of the packed (32, 128) parameter-vector array.
R_B1, R_A0, R_D0 = 0, 1, 2
R_B2, R_BN2S, R_BN2O = 3, 4, 5
R_A1, R_D1, R_A2, R_D2, R_A3, R_D3 = 6, 7, 8, 9, 10, 11
R_B3, R_BN3S, R_BN3O = 12, 13, 14
R_A4, R_D4, R_A5, R_D5, R_A6, R_D6 = 15, 16, 17, 18, 19, 20
R_B4, R_BN4S, R_BN4O = 21, 22, 23
R_A7, R_D7, R_A8, R_D8, R_A9, R_D9 = 24, 25, 26, 27, 28, 29
R_W5, R_B5 = 30, 31
N_VEC_ROWS = 32
_ALPHA_ROWS = (R_A0, R_A1, R_A2, R_A3, R_A4, R_A5, R_A6, R_A7, R_A8, R_A9)
_DISTR_ROWS = (R_D0, R_D1, R_D2, R_D3, R_D4, R_D5, R_D6, R_D7, R_D8, R_D9)


def _round_up(n, m):
    return ((n + m - 1) // m) * m


# ----------------------------------------------------------------------------
# Pallas kernel: whole forward pass (matmuls + BN affine + act_on + sigmoid)
# ----------------------------------------------------------------------------
def ember_kernel(x_ref, w1_ref, w234_ref, vecs_ref, out_ref, xpad_ref):
    def row(r):
        return vecs_ref[r:r + 1, :]                     # (1, 128), bcast over batch

    def act_on(h, a_row, d_row, beta):
        # a_row holds ALPHA on masked columns, 0 elsewhere (pre-baked at pack time).
        d = h - row(d_row)
        sel = jnp.where(jnp.abs(d) < beta, d, 0.0)
        return h - row(a_row) * sel

    tb = xpad_ref.shape[0]
    # Build the K-padded bf16 fc1 operand in VMEM scratch.  Zero the 51 padding
    # columns every step (unconditional: robust to core-parallel grid sharding,
    # and the cost is trivial), then write the cast of the streamed f32 block.
    xpad_ref[:, IN_DIM:] = jnp.zeros((tb, K_PAD - IN_DIM), jnp.bfloat16)
    xpad_ref[:, :IN_DIM] = x_ref[...].astype(jnp.bfloat16)

    # input_layer: bf16 x @ bf16 w1 on the MXU, f32 accumulate; + b1, relu
    h = jnp.dot(xpad_ref[...], w1_ref[...], preferred_element_type=jnp.float32)
    h = jnp.maximum(h + row(R_B1), 0.0)                 # (tb, 128)
    h = act_on(h, R_A0, R_D0, BETAS[0])

    # hidden_layer1 (128 -> 64, zero-padded to 128 lanes), bf16 operands
    h = jnp.dot(h.astype(jnp.bfloat16), w234_ref[0],
                preferred_element_type=jnp.float32) + row(R_B2)
    h = act_on(h, R_A1, R_D1, BETAS[1])
    h = jnp.maximum(h * row(R_BN2S) + row(R_BN2O), 0.0)  # bn2 (eval) + relu
    h = act_on(h, R_A2, R_D2, BETAS[2])
    # dropout1: identity in eval mode
    h = act_on(h, R_A3, R_D3, BETAS[3])

    # hidden_layer2 (64 -> 32, padded)
    h = jnp.dot(h.astype(jnp.bfloat16), w234_ref[1],
                preferred_element_type=jnp.float32) + row(R_B3)
    h = act_on(h, R_A4, R_D4, BETAS[4])
    h = jnp.maximum(h * row(R_BN3S) + row(R_BN3O), 0.0)
    h = act_on(h, R_A5, R_D5, BETAS[5])
    # dropout2: identity in eval mode
    h = act_on(h, R_A6, R_D6, BETAS[6])

    # hidden_layer3 (32 -> 16, padded)
    h = jnp.dot(h.astype(jnp.bfloat16), w234_ref[2],
                preferred_element_type=jnp.float32) + row(R_B4)
    h = act_on(h, R_A7, R_D7, BETAS[7])
    h = jnp.maximum(h * row(R_BN4S) + row(R_BN4O), 0.0)
    h = act_on(h, R_A8, R_D8, BETAS[8])
    # dropout3: identity in eval mode
    h = act_on(h, R_A9, R_D9, BETAS[9])

    # output_layer (16 -> 1) as a lane reduction (w5 row is zero-padded), + sigmoid.
    # (tb,1) masked stores are negligible vs the x stream; keep the layout simple.
    logits = jnp.sum(h * row(R_W5), axis=-1, keepdims=True) + vecs_ref[R_B5:R_B5 + 1, 0:1]
    out_ref[...] = jax.nn.sigmoid(logits)


# ----------------------------------------------------------------------------
# Wrapper — NO pre-pass over x; f32 x is streamed straight into the kernel.
# ----------------------------------------------------------------------------
def ember_forward(x, packed, tile_b=1024, vmem_limit_bytes=48 << 20):
    """Defaults sized for v7x (64 MiB physical VMEM): double-buffered f32 x
    stream at tb=1024 is ~20 MB + 5 MB bf16 scratch + <2 MB resident weights.
    On v5e/v6e (128 MiB VMEM) pass tile_b=2048, vmem_limit_bytes=96<<20."""
    w1_pad, w234, vecs = packed
    B = x.shape[0]
    tb = min(tile_b, _round_up(B, 8))       # small batches -> single small tile
    tb = max(8, (tb // 8) * 8)              # block sublane dim must be a multiple of 8

    out = pl.pallas_call(
        ember_kernel,
        out_shape=jax.ShapeDtypeStruct((B, 1), jnp.float32),
        grid=(pl.cdiv(B, tb),),             # ragged last tile handled by Pallas masking
        in_specs=[
            # streamed f32 activations; last dim = full array dim (exempt from 128 rule)
            pl.BlockSpec((tb, IN_DIM), lambda i: (i, 0)),
            # resident blocks (constant index maps -> fetched once, not re-DMA'd)
            pl.BlockSpec((K_PAD, 128), lambda i: (0, 0)),       # fc1 weights (bf16)
            pl.BlockSpec((3, 128, 128), lambda i: (0, 0, 0)),   # padded w2/w3/w4 (bf16)
            pl.BlockSpec((N_VEC_ROWS, 128), lambda i: (0, 0)),  # packed small vectors
        ],
        out_specs=pl.BlockSpec((tb, 1), lambda i: (i, 0)),
        scratch_shapes=[pltpu.VMEM((tb, K_PAD), jnp.bfloat16)],  # K-padded fc1 operand
        compiler_params=pltpu.CompilerParams(
            dimension_semantics=("parallel",),   # batch tiles shard across v7x's 2 TCs
            vmem_limit_bytes=vmem_limit_bytes,
        ),
    )(x, w1_pad, w234, vecs)
    return out


# ----------------------------------------------------------------------------
# Deterministic parameter construction (logical, unpadded)
# ----------------------------------------------------------------------------
def make_params(key):
    ks = iter(jax.random.split(key, 24))

    def lin(in_d, out_d):
        w = jax.random.normal(next(ks), (in_d, out_d), jnp.float32) / jnp.sqrt(in_d)
        b = 0.01 * jax.random.normal(next(ks), (out_d,), jnp.float32)
        return w, b

    w1, b1 = lin(IN_DIM, 128)
    w2, b2 = lin(128, 64)
    w3, b3 = lin(64, 32)
    w4, b4 = lin(32, 16)
    w5m, b5 = lin(16, 1)
    w5 = w5m[:, 0]                                   # (16,)

    def bn(dim):
        gamma = 1.0 + 0.1 * jax.random.normal(next(ks), (dim,), jnp.float32)
        beta = 0.1 * jax.random.normal(next(ks), (dim,), jnp.float32)
        mean = 0.05 * jax.random.normal(next(ks), (dim,), jnp.float32)
        var = 1.0 + 0.1 * jnp.abs(jax.random.normal(next(ks), (dim,), jnp.float32))
        scale = gamma / jnp.sqrt(var + 1e-5)
        shift = beta - mean * scale
        return scale, shift

    bn2s, bn2o = bn(64)
    bn3s, bn3o = bn(32)
    bn4s, bn4o = bn(16)

    dkeys = jax.random.split(next(ks), 10)
    distrs = [0.2 * jax.random.normal(dkeys[i], (ACT_DIMS[i],), jnp.float32)
              for i in range(10)]

    return (w1, b1, w2, b2, bn2s, bn2o, w3, b3, bn3s, bn3o,
            w4, b4, bn4s, bn4o, w5, b5, distrs)


# ----------------------------------------------------------------------------
# Pack/pad parameters into the kernel's layout (one-time, tiny)
# ----------------------------------------------------------------------------
def pack_params(params):
    (w1, b1, w2, b2, bn2s, bn2o, w3, b3, bn3s, bn3o,
     w4, b4, bn4s, bn4o, w5, b5, distrs) = params

    # fc1 weights: zero-pad K to 2432, store as bf16 (MXU dtype).
    w1_pad = jnp.zeros((K_PAD, 128), jnp.float32).at[:IN_DIM, :].set(w1)
    w1_pad = w1_pad.astype(jnp.bfloat16)

    def pad_mat(w):
        return jnp.zeros((128, 128), jnp.float32).at[:w.shape[0], :w.shape[1]].set(w)

    # hidden weights resident as bf16 (review opt: bf16 MXU passes, half the VMEM)
    w234 = jnp.stack([pad_mat(w2), pad_mat(w3), pad_mat(w4)]).astype(jnp.bfloat16)

    def pad_row(v):
        v = jnp.asarray(v, jnp.float32).reshape(-1)
        return jnp.zeros((128,), jnp.float32).at[:v.shape[0]].set(v)

    def alpha_row(i):
        # ALPHA pre-baked into the column mask (saves a compare + and per act_on)
        idx = jnp.asarray(SPECIFIC_INDICES[i], jnp.int32)
        return jnp.zeros((128,), jnp.float32).at[idx].set(ALPHA)

    rows = [jnp.zeros((128,), jnp.float32)] * N_VEC_ROWS
    rows[R_B1] = pad_row(b1)
    rows[R_B2], rows[R_BN2S], rows[R_BN2O] = pad_row(b2), pad_row(bn2s), pad_row(bn2o)
    rows[R_B3], rows[R_BN3S], rows[R_BN3O] = pad_row(b3), pad_row(bn3s), pad_row(bn3o)
    rows[R_B4], rows[R_BN4S], rows[R_BN4O] = pad_row(b4), pad_row(bn4s), pad_row(bn4o)
    rows[R_W5], rows[R_B5] = pad_row(w5), pad_row(b5)
    for i in range(10):
        rows[_ALPHA_ROWS[i]] = alpha_row(i)
        rows[_DISTR_ROWS[i]] = pad_row(distrs[i])
    vecs = jnp.stack(rows)                                       # (32, 128) f32

    return w1_pad, w234, vecs


# ----------------------------------------------------------------------------
# Pure-JAX references.
#   use_bf16=True : mirrors the kernel's bf16 matmul numerics (tight check).
#   use_bf16=False: true f32 eval-mode math of the torch module (drift check;
#                   act_on's hard |delta|<beta threshold means bf16 can flip a
#                   few elements, so only a loose bound is asserted).
# ----------------------------------------------------------------------------
def ember_reference(x, params, use_bf16):
    (w1, b1, w2, b2, bn2s, bn2o, w3, b3, bn3s, bn3o,
     w4, b4, bn4s, bn4o, w5, b5, distrs) = params

    def dot(a, w):
        if use_bf16:
            return jnp.dot(a.astype(jnp.bfloat16), w.astype(jnp.bfloat16),
                           preferred_element_type=jnp.float32)
        return jnp.dot(a, w)

    def act_on(h, i):
        d_dim = h.shape[-1]
        idx = jnp.asarray(SPECIFIC_INDICES[i], jnp.int32)
        am = jnp.zeros((d_dim,), jnp.float32).at[idx].set(ALPHA)
        d = h - jnp.asarray(distrs[i], jnp.float32)
        sel = jnp.where(jnp.abs(d) < BETAS[i], d, 0.0)
        return h - am * sel

    h = jnp.maximum(dot(x, w1) + b1, 0.0)
    h = act_on(h, 0)
    h = dot(h, w2) + b2
    h = act_on(h, 1)
    h = jnp.maximum(h * bn2s + bn2o, 0.0)
    h = act_on(h, 2)
    h = act_on(h, 3)
    h = dot(h, w3) + b3
    h = act_on(h, 4)
    h = jnp.maximum(h * bn3s + bn3o, 0.0)
    h = act_on(h, 5)
    h = act_on(h, 6)
    h = dot(h, w4) + b4
    h = act_on(h, 7)
    h = jnp.maximum(h * bn4s + bn4o, 0.0)
    h = act_on(h, 8)
    h = act_on(h, 9)
    logits = h @ w5[:, None] + b5
    return jax.nn.sigmoid(logits)


# ----------------------------------------------------------------------------
if __name__ == "__main__":
    key = jax.random.PRNGKey(0)
    kx, kp = jax.random.split(key)

    B = 8
    x = jax.random.normal(kx, (B, IN_DIM), jnp.float32)
    params = make_params(kp)
    packed = pack_params(params)

    out = jax.block_until_ready(ember_forward(x, packed))
    ref_matched = jax.block_until_ready(ember_reference(x, params, use_bf16=True))
    ref_f32 = jax.block_until_ready(ember_reference(x, params, use_bf16=False))

    assert out.shape == (B, 1) and out.dtype == jnp.float32
    # Tight check against a numerics-matched (bf16 matmul) reference.
    assert jnp.allclose(out, ref_matched, rtol=5e-3, atol=5e-3), (out, ref_matched)
    # Loose sanity bound vs. the true f32 model (bf16 + act_on threshold flips
    # can cause small discrete jumps; a large drift would indicate a real bug).
    drift = float(jnp.max(jnp.abs(out - ref_f32)))
    assert drift < 0.25, drift
    print("KERNEL_OK")
</pallas_src>

<mosaic_0001>
module attributes {stable_mosaic.version = 11 : i64} {
  func.func @ember_kernel(%arg0: i32, %arg1: memref<8x2381xf32, #tpu.memory_space<vmem>>, %arg2: memref<2432x128xbf16, #tpu.memory_space<vmem>>, %arg3: memref<3x128x128xbf16, #tpu.memory_space<vmem>>, %arg4: memref<32x128xf32, #tpu.memory_space<vmem>>, %arg5: memref<8x1xf32, #tpu.memory_space<vmem>>, %arg6: memref<8x2432xbf16, #tpu.memory_space<vmem>>) attributes {dimension_semantics = [#tpu.dimension_semantics<parallel>], iteration_bounds = array<i64: 1>, scalar_prefetch = 0 : i64, scratch_operands = 1 : i64, tpu.core_type = #tpu.core_type<tc>, window_params = [{transform_indices = @transform_0, window_bounds = array<i64: 8, 2381>}, {pipeline_mode = #tpu.pipeline_mode<synchronous>, transform_indices = @transform_1, window_bounds = array<i64: 2432, 128>}, {pipeline_mode = #tpu.pipeline_mode<synchronous>, transform_indices = @transform_2, window_bounds = array<i64: 3, 128, 128>}, {pipeline_mode = #tpu.pipeline_mode<synchronous>, transform_indices = @transform_3, window_bounds = array<i64: 32, 128>}, {transform_indices = @transform_4, window_bounds = array<i64: 8, 1>}]} {
    %cst = arith.constant 0.000000e+00 : bf16
    %0 = vector.broadcast %cst : bf16 to vector<8x51xbf16>
    %c0 = arith.constant 0 : index
    %c2381 = arith.constant 2381 : index
    %1 = vector.load %arg6[%c0, %c2381] : memref<8x2432xbf16, #tpu.memory_space<vmem>>, vector<8x51xbf16>
    tpu.vector_store %arg6[%c0, %c2381], %0 {strides = array<i32>} : memref<8x2432xbf16, #tpu.memory_space<vmem>>, vector<8x51xbf16>,
    %c0_0 = arith.constant 0 : index
    %c0_1 = arith.constant 0 : index
    %2 = vector.load %arg1[%c0_0, %c0_1] : memref<8x2381xf32, #tpu.memory_space<vmem>>, vector<8x2381xf32>
    %3 = arith.truncf %2 : vector<8x2381xf32> to vector<8x2381xbf16>
    %c0_2 = arith.constant 0 : index
    %c0_3 = arith.constant 0 : index
    %4 = vector.load %arg6[%c0_2, %c0_3] : memref<8x2432xbf16, #tpu.memory_space<vmem>>, vector<8x2381xbf16>
    tpu.vector_store %arg6[%c0_2, %c0_3], %3 {strides = array<i32>} : memref<8x2432xbf16, #tpu.memory_space<vmem>>, vector<8x2381xbf16>,
    %c0_4 = arith.constant 0 : index
    %c0_5 = arith.constant 0 : index
    %5 = vector.load %arg6[%c0_4, %c0_5] : memref<8x2432xbf16, #tpu.memory_space<vmem>>, vector<8x2432xbf16>
    %c0_6 = arith.constant 0 : index
    %c0_7 = arith.constant 0 : index
    %6 = vector.load %arg2[%c0_6, %c0_7] : memref<2432x128xbf16, #tpu.memory_space<vmem>>, vector<2432x128xbf16>
    %cst_8 = arith.constant dense<0.000000e+00> : vector<8x128xf32>
    %7 = tpu.matmul %5, %6, %cst_8 {dimension_numbers = #tpu.dot_dimension_numbers<[1], [0], [0], [1], [0, 0, 1, 1], [], []>} : vector<8x2432xbf16>, vector<2432x128xbf16>, vector<8x128xf32> -> vector<8x128xf32>
    %c0_9 = arith.constant 0 : index
    %c0_10 = arith.constant 0 : index
    %8 = vector.load %arg4[%c0_9, %c0_10] : memref<32x128xf32, #tpu.memory_space<vmem>>, vector<1x128xf32>
    %9 = vector.broadcast %8 : vector<1x128xf32> to vector<8x128xf32>
    %10 = arith.addf %7, %9 : vector<8x128xf32>
    %cst_11 = arith.constant 0.000000e+00 : f32
    %11 = vector.broadcast %cst_11 : f32 to vector<8x128xf32>
    %12 = arith.maximumf %10, %11 : vector<8x128xf32>
    %c2 = arith.constant 2 : index
    %c0_12 = arith.constant 0 : index
    %13 = vector.load %arg4[%c2, %c0_12] : memref<32x128xf32, #tpu.memory_space<vmem>>, vector<1x128xf32>
    %14 = vector.broadcast %13 : vector<1x128xf32> to vector<8x128xf32>
    %15 = arith.subf %12, %14 : vector<8x128xf32>
    %16 = math.absf %15 : vector<8x128xf32>
    %cst_13 = arith.constant 3.000000e-01 : f32
    %17 = vector.broadcast %cst_13 : f32 to vector<8x128xf32>
    %18 = arith.cmpf olt, %16, %17 : vector<8x128xf32>
    %cst_14 = arith.constant 0.000000e+00 : f32
    %19 = vector.broadcast %cst_14 : f32 to vector<8x128xf32>
    %20 = arith.select %18, %15, %19 : vector<8x128xi1>, vector<8x128xf32>
    %c1 = arith.constant 1 : index
    %c0_15 = arith.constant 0 : index
    %21 = vector.load %arg4[%c1, %c0_15] : memref<32x128xf32, #tpu.memory_space<vmem>>, vector<1x128xf32>
    %22 = vector.broadcast %21 : vector<1x128xf32> to vector<8x128xf32>
    %23 = arith.mulf %22, %20 : vector<8x128xf32>
    %24 = arith.subf %12, %23 : vector<8x128xf32>
    %25 = arith.truncf %24 : vector<8x128xf32> to vector<8x128xbf16>
    %c0_16 = arith.constant 0 : index
    %c0_17 = arith.constant 0 : index
    %c0_18 = arith.constant 0 : index
    %26 = vector.load %arg3[%c0_16, %c0_17, %c0_18] : memref<3x128x128xbf16, #tpu.memory_space<vmem>>, vector<1x128x128xbf16>
    %27 = vector.shape_cast %26 : vector<1x128x128xbf16> to vector<128x128xbf16>
    %cst_19 = arith.constant dense<0.000000e+00> : vector<8x128xf32>
    %28 = tpu.matmul %25, %27, %cst_19 {dimension_numbers = #tpu.dot_dimension_numbers<[1], [0], [0], [1], [0, 0, 1, 1], [], []>} : vector<8x128xbf16>, vector<128x128xbf16>, vector<8x128xf32> -> vector<8x128xf32>
    %c3 = arith.constant 3 : index
    %c0_20 = arith.constant 0 : index
    %29 = vector.load %arg4[%c3, %c0_20] : memref<32x128xf32, #tpu.memory_space<vmem>>, vector<1x128xf32>
    %30 = vector.broadcast %29 : vector<1x128xf32> to vector<8x128xf32>
    %31 = arith.addf %28, %30 : vector<8x128xf32>
    %c7 = arith.constant 7 : index
    %c0_21 = arith.constant 0 : index
    %32 = vector.load %arg4[%c7, %c0_21] : memref<32x128xf32, #tpu.memory_space<vmem>>, vector<1x128xf32>
    %33 = vector.broadcast %32 : vector<1x128xf32> to vector<8x128xf32>
    %34 = arith.subf %31, %33 : vector<8x128xf32>
    %35 = math.absf %34 : vector<8x128xf32>
    %cst_22 = arith.constant 2.500000e-01 : f32
    %36 = vector.broadcast %cst_22 : f32 to vector<8x128xf32>
    %37 = arith.cmpf olt, %35, %36 : vector<8x128xf32>
    %cst_23 = arith.constant 0.000000e+00 : f32
    %38 = vector.broadcast %cst_23 : f32 to vector<8x128xf32>
    %39 = arith.select %37, %34, %38 : vector<8x128xi1>, vector<8x128xf32>
    %c6 = arith.constant 6 : index
    %c0_24 = arith.constant 0 : index
    %40 = vector.load %arg4[%c6, %c0_24] : memref<32x128xf32, #tpu.memory_space<vmem>>, vector<1x128xf32>
    %41 = vector.broadcast %40 : vector<1x128xf32> to vector<8x128xf32>
    %42 = arith.mulf %41, %39 : vector<8x128xf32>
    %43 = arith.subf %31, %42 : vector<8x128xf32>
    %c4 = arith.constant 4 : index
    %c0_25 = arith.constant 0 : index
    %44 = vector.load %arg4[%c4, %c0_25] : memref<32x128xf32, #tpu.memory_space<vmem>>, vector<1x128xf32>
    %45 = vector.broadcast %44 : vector<1x128xf32> to vector<8x128xf32>
    %46 = arith.mulf %43, %45 : vector<8x128xf32>
    %c5 = arith.constant 5 : index
    %c0_26 = arith.constant 0 : index
    %47 = vector.load %arg4[%c5, %c0_26] : memref<32x128xf32, #tpu.memory_space<vmem>>, vector<1x128xf32>
    %48 = vector.broadcast %47 : vector<1x128xf32> to vector<8x128xf32>
    %49 = arith.addf %46, %48 : vector<8x128xf32>
    %cst_27 = arith.constant 0.000000e+00 : f32
    %50 = vector.broadcast %cst_27 : f32 to vector<8x128xf32>
    %51 = arith.maximumf %49, %50 : vector<8x128xf32>
    %c9 = arith.constant 9 : index
    %c0_28 = arith.constant 0 : index
    %52 = vector.load %arg4[%c9, %c0_28] : memref<32x128xf32, #tpu.memory_space<vmem>>, vector<1x128xf32>
    %53 = vector.broadcast %52 : vector<1x128xf32> to vector<8x128xf32>
    %54 = arith.subf %51, %53 : vector<8x128xf32>
    %55 = math.absf %54 : vector<8x128xf32>
    %cst_29 = arith.constant 2.000000e-01 : f32
    %56 = vector.broadcast %cst_29 : f32 to vector<8x128xf32>
    %57 = arith.cmpf olt, %55, %56 : vector<8x128xf32>
    %cst_30 = arith.constant 0.000000e+00 : f32
    %58 = vector.broadcast %cst_30 : f32 to vector<8x128xf32>
    %59 = arith.select %57, %54, %58 : vector<8x128xi1>, vector<8x128xf32>
    %c8 = arith.constant 8 : index
    %c0_31 = arith.constant 0 : index
    %60 = vector.load %arg4[%c8, %c0_31] : memref<32x128xf32, #tpu.memory_space<vmem>>, vector<1x128xf32>
    %61 = vector.broadcast %60 : vector<1x128xf32> to vector<8x128xf32>
    %62 = arith.mulf %61, %59 : vector<8x128xf32>
    %63 = arith.subf %51, %62 : vector<8x128xf32>
    %c11 = arith.constant 11 : index
    %c0_32 = arith.constant 0 : index
    %64 = vector.load %arg4[%c11, %c0_32] : memref<32x128xf32, #tpu.memory_space<vmem>>, vector<1x128xf32>
    %65 = vector.broadcast %64 : vector<1x128xf32> to vector<8x128xf32>
    %66 = arith.subf %63, %65 : vector<8x128xf32>
    %67 = math.absf %66 : vector<8x128xf32>
    %cst_33 = arith.constant 3.500000e-01 : f32
    %68 = vector.broadcast %cst_33 : f32 to vector<8x128xf32>
    %69 = arith.cmpf olt, %67, %68 : vector<8x128xf32>
    %cst_34 = arith.constant 0.000000e+00 : f32
    %70 = vector.broadcast %cst_34 : f32 to vector<8x128xf32>
    %71 = arith.select %69, %66, %70 : vector<8x128xi1>, vector<8x128xf32>
    %c10 = arith.constant 10 : index
    %c0_35 = arith.constant 0 : index
    %72 = vector.load %arg4[%c10, %c0_35] : memref<32x128xf32, #tpu.memory_space<vmem>>, vector<1x128xf32>
    %73 = vector.broadcast %72 : vector<1x128xf32> to vector<8x128xf32>
    %74 = arith.mulf %73, %71 : vector<8x128xf32>
    %75 = arith.subf %63, %74 : vector<8x128xf32>
    %76 = arith.truncf %75 : vector<8x128xf32> to vector<8x128xbf16>
    %c1_36 = arith.constant 1 : index
    %c0_37 = arith.constant 0 : index
    %c0_38 = arith.constant 0 : index
    %77 = vector.load %arg3[%c1_36, %c0_37, %c0_38] : memref<3x128x128xbf16, #tpu.memory_space<vmem>>, vector<1x128x128xbf16>
    %78 = vector.shape_cast %77 : vector<1x128x128xbf16> to vector<128x128xbf16>
    %cst_39 = arith.constant dense<0.000000e+00> : vector<8x128xf32>
    %79 = tpu.matmul %76, %78, %cst_39 {dimension_numbers = #tpu.dot_dimension_numbers<[1], [0], [0], [1], [0, 0, 1, 1], [], []>} : vector<8x128xbf16>, vector<128x128xbf16>, vector<8x128xf32> -> vector<8x128xf32>
    %c12 = arith.constant 12 : index
    %c0_40 = arith.constant 0 : index
    %80 = vector.load %arg4[%c12, %c0_40] : memref<32x128xf32, #tpu.memory_space<vmem>>, vector<1x128xf32>
    %81 = vector.broadcast %80 : vector<1x128xf32> to vector<8x128xf32>
    %82 = arith.addf %79, %81 : vector<8x128xf32>
    %c16 = arith.constant 16 : index
    %c0_41 = arith.constant 0 : index
    %83 = vector.load %arg4[%c16, %c0_41] : memref<32x128xf32, #tpu.memory_space<vmem>>, vector<1x128xf32>
    %84 = vector.broadcast %83 : vector<1x128xf32> to vector<8x128xf32>
    %85 = arith.subf %82, %84 : vector<8x128xf32>
    %86 = math.absf %85 : vector<8x128xf32>
    %cst_42 = arith.constant 4.000000e-01 : f32
    %87 = vector.broadcast %cst_42 : f32 to vector<8x128xf32>
    %88 = arith.cmpf olt, %86, %87 : vector<8x128xf32>
    %cst_43 = arith.constant 0.000000e+00 : f32
    %89 = vector.broadcast %cst_43 : f32 to vector<8x128xf32>
    %90 = arith.select %88, %85, %89 : vector<8x128xi1>, vector<8x128xf32>
    %c15 = arith.constant 15 : index
    %c0_44 = arith.constant 0 : index
    %91 = vector.load %arg4[%c15, %c0_44] : memref<32x128xf32, #tpu.memory_space<vmem>>, vector<1x128xf32>
    %92 = vector.broadcast %91 : vector<1x128xf32> to vector<8x128xf32>
    %93 = arith.mulf %92, %90 : vector<8x128xf32>
    %94 = arith.subf %82, %93 : vector<8x128xf32>
    %c13 = arith.constant 13 : index
    %c0_45 = arith.constant 0 : index
    %95 = vector.load %arg4[%c13, %c0_45] : memref<32x128xf32, #tpu.memory_space<vmem>>, vector<1x128xf32>
    %96 = vector.broadcast %95 : vector<1x128xf32> to vector<8x128xf32>
    %97 = arith.mulf %94, %96 : vector<8x128xf32>
    %c14 = arith.constant 14 : index
    %c0_46 = arith.constant 0 : index
    %98 = vector.load %arg4[%c14, %c0_46] : memref<32x128xf32, #tpu.memory_space<vmem>>, vector<1x128xf32>
    %99 = vector.broadcast %98 : vector<1x128xf32> to vector<8x128xf32>
    %100 = arith.addf %97, %99 : vector<8x128xf32>
    %cst_47 = arith.constant 0.000000e+00 : f32
    %101 = vector.broadcast %cst_47 : f32 to vector<8x128xf32>
    %102 = arith.maximumf %100, %101 : vector<8x128xf32>
    %c18 = arith.constant 18 : index
    %c0_48 = arith.constant 0 : index
    %103 = vector.load %arg4[%c18, %c0_48] : memref<32x128xf32, #tpu.memory_space<vmem>>, vector<1x128xf32>
    %104 = vector.broadcast %103 : vector<1x128xf32> to vector<8x128xf32>
    %105 = arith.subf %102, %104 : vector<8x128xf32>
    %106 = math.absf %105 : vector<8x128xf32>
    %cst_49 = arith.constant 1.500000e-01 : f32
    %107 = vector.broadcast %cst_49 : f32 to vector<8x128xf32>
    %108 = arith.cmpf olt, %106, %107 : vector<8x128xf32>
    %cst_50 = arith.constant 0.000000e+00 : f32
    %109 = vector.broadcast %cst_50 : f32 to vector<8x128xf32>
    %110 = arith.select %108, %105, %109 : vector<8x128xi1>, vector<8x128xf32>
    %c17 = arith.constant 17 : index
    %c0_51 = arith.constant 0 : index
    %111 = vector.load %arg4[%c17, %c0_51] : memref<32x128xf32, #tpu.memory_space<vmem>>, vector<1x128xf32>
    %112 = vector.broadcast %111 : vector<1x128xf32> to vector<8x128xf32>
    %113 = arith.mulf %112, %110 : vector<8x128xf32>
    %114 = arith.subf %102, %113 : vector<8x128xf32>
    %c20 = arith.constant 20 : index
    %c0_52 = arith.constant 0 : index
    %115 = vector.load %arg4[%c20, %c0_52] : memref<32x128xf32, #tpu.memory_space<vmem>>, vector<1x128xf32>
    %116 = vector.broadcast %115 : vector<1x128xf32> to vector<8x128xf32>
    %117 = arith.subf %114, %116 : vector<8x128xf32>
    %118 = math.absf %117 : vector<8x128xf32>
    %cst_53 = arith.constant 3.000000e-01 : f32
    %119 = vector.broadcast %cst_53 : f32 to vector<8x128xf32>
    %120 = arith.cmpf olt, %118, %119 : vector<8x128xf32>
    %cst_54 = arith.constant 0.000000e+00 : f32
    %121 = vector.broadcast %cst_54 : f32 to vector<8x128xf32>
    %122 = arith.select %120, %117, %121 : vector<8x128xi1>, vector<8x128xf32>
    %c19 = arith.constant 19 : index
    %c0_55 = arith.constant 0 : index
    %123 = vector.load %arg4[%c19, %c0_55] : memref<32x128xf32, #tpu.memory_space<vmem>>, vector<1x128xf32>
    %124 = vector.broadcast %123 : vector<1x128xf32> to vector<8x128xf32>
    %125 = arith.mulf %124, %122 : vector<8x128xf32>
    %126 = arith.subf %114, %125 : vector<8x128xf32>
    %127 = arith.truncf %126 : vector<8x128xf32> to vector<8x128xbf16>
    %c2_56 = arith.constant 2 : index
    %c0_57 = arith.constant 0 : index
    %c0_58 = arith.constant 0 : index
    %128 = vector.load %arg3[%c2_56, %c0_57, %c0_58] : memref<3x128x128xbf16, #tpu.memory_space<vmem>>, vector<1x128x128xbf16>
    %129 = vector.shape_cast %128 : vector<1x128x128xbf16> to vector<128x128xbf16>
    %cst_59 = arith.constant dense<0.000000e+00> : vector<8x128xf32>
    %130 = tpu.matmul %127, %129, %cst_59 {dimension_numbers = #tpu.dot_dimension_numbers<[1], [0], [0], [1], [0, 0, 1, 1], [], []>} : vector<8x128xbf16>, vector<128x128xbf16>, vector<8x128xf32> -> vector<8x128xf32>
    %c21 = arith.constant 21 : index
    %c0_60 = arith.constant 0 : index
    %131 = vector.load %arg4[%c21, %c0_60] : memref<32x128xf32, #tpu.memory_space<vmem>>, vector<1x128xf32>
    %132 = vector.broadcast %131 : vector<1x128xf32> to vector<8x128xf32>
    %133 = arith.addf %130, %132 : vector<8x128xf32>
    %c25 = arith.constant 25 : index
    %c0_61 = arith.constant 0 : index
    %134 = vector.load %arg4[%c25, %c0_61] : memref<32x128xf32, #tpu.memory_space<vmem>>, vector<1x128xf32>
    %135 = vector.broadcast %134 : vector<1x128xf32> to vector<8x128xf32>
    %136 = arith.subf %133, %135 : vector<8x128xf32>
    %137 = math.absf %136 : vector<8x128xf32>
    %cst_62 = arith.constant 2.500000e-01 : f32
    %138 = vector.broadcast %cst_62 : f32 to vector<8x128xf32>
    %139 = arith.cmpf olt, %137, %138 : vector<8x128xf32>
    %cst_63 = arith.constant 0.000000e+00 : f32
    %140 = vector.broadcast %cst_63 : f32 to vector<8x128xf32>
    %141 = arith.select %139, %136, %140 : vector<8x128xi1>, vector<8x128xf32>
    %c24 = arith.constant 24 : index
    %c0_64 = arith.constant 0 : index
    %142 = vector.load %arg4[%c24, %c0_64] : memref<32x128xf32, #tpu.memory_space<vmem>>, vector<1x128xf32>
    %143 = vector.broadcast %142 : vector<1x128xf32> to vector<8x128xf32>
    %144 = arith.mulf %143, %141 : vector<8x128xf32>
    %145 = arith.subf %133, %144 : vector<8x128xf32>
    %c22 = arith.constant 22 : index
    %c0_65 = arith.constant 0 : index
    %146 = vector.load %arg4[%c22, %c0_65] : memref<32x128xf32, #tpu.memory_space<vmem>>, vector<1x128xf32>
    %147 = vector.broadcast %146 : vector<1x128xf32> to vector<8x128xf32>
    %148 = arith.mulf %145, %147 : vector<8x128xf32>
    %c23 = arith.constant 23 : index
    %c0_66 = arith.constant 0 : index
    %149 = vector.load %arg4[%c23, %c0_66] : memref<32x128xf32, #tpu.memory_space<vmem>>, vector<1x128xf32>
    %150 = vector.broadcast %149 : vector<1x128xf32> to vector<8x128xf32>
    %151 = arith.addf %148, %150 : vector<8x128xf32>
    %cst_67 = arith.constant 0.000000e+00 : f32
    %152 = vector.broadcast %cst_67 : f32 to vector<8x128xf32>
    %153 = arith.maximumf %151, %152 : vector<8x128xf32>
    %c27 = arith.constant 27 : index
    %c0_68 = arith.constant 0 : index
    %154 = vector.load %arg4[%c27, %c0_68] : memref<32x128xf32, #tpu.memory_space<vmem>>, vector<1x128xf32>
    %155 = vector.broadcast %154 : vector<1x128xf32> to vector<8x128xf32>
    %156 = arith.subf %153, %155 : vector<8x128xf32>
    %157 = math.absf %156 : vector<8x128xf32>
    %cst_69 = arith.constant 2.000000e-01 : f32
    %158 = vector.broadcast %cst_69 : f32 to vector<8x128xf32>
    %159 = arith.cmpf olt, %157, %158 : vector<8x128xf32>
    %cst_70 = arith.constant 0.000000e+00 : f32
    %160 = vector.broadcast %cst_70 : f32 to vector<8x128xf32>
    %161 = arith.select %159, %156, %160 : vector<8x128xi1>, vector<8x128xf32>
    %c26 = arith.constant 26 : index
    %c0_71 = arith.constant 0 : index
    %162 = vector.load %arg4[%c26, %c0_71] : memref<32x128xf32, #tpu.memory_space<vmem>>, vector<1x128xf32>
    %163 = vector.broadcast %162 : vector<1x128xf32> to vector<8x128xf32>
    %164 = arith.mulf %163, %161 : vector<8x128xf32>
    %165 = arith.subf %153, %164 : vector<8x128xf32>
    %c29 = arith.constant 29 : index
    %c0_72 = arith.constant 0 : index
    %166 = vector.load %arg4[%c29, %c0_72] : memref<32x128xf32, #tpu.memory_space<vmem>>, vector<1x128xf32>
    %167 = vector.broadcast %166 : vector<1x128xf32> to vector<8x128xf32>
    %168 = arith.subf %165, %167 : vector<8x128xf32>
    %169 = math.absf %168 : vector<8x128xf32>
    %cst_73 = arith.constant 3.000000e-01 : f32
    %170 = vector.broadcast %cst_73 : f32 to vector<8x128xf32>
    %171 = arith.cmpf olt, %169, %170 : vector<8x128xf32>
    %cst_74 = arith.constant 0.000000e+00 : f32
    %172 = vector.broadcast %cst_74 : f32 to vector<8x128xf32>
    %173 = arith.select %171, %168, %172 : vector<8x128xi1>, vector<8x128xf32>
    %c28 = arith.constant 28 : index
    %c0_75 = arith.constant 0 : index
    %174 = vector.load %arg4[%c28, %c0_75] : memref<32x128xf32, #tpu.memory_space<vmem>>, vector<1x128xf32>
    %175 = vector.broadcast %174 : vector<1x128xf32> to vector<8x128xf32>
    %176 = arith.mulf %175, %173 : vector<8x128xf32>
    %177 = arith.subf %165, %176 : vector<8x128xf32>
    %c30 = arith.constant 30 : index
    %c0_76 = arith.constant 0 : index
    %178 = vector.load %arg4[%c30, %c0_76] : memref<32x128xf32, #tpu.memory_space<vmem>>, vector<1x128xf32>
    %179 = vector.broadcast %178 : vector<1x128xf32> to vector<8x128xf32>
    %180 = arith.mulf %177, %179 : vector<8x128xf32>
    %cst_77 = arith.constant dense<0.000000e+00> : vector<8xf32>
    %181 = vector.multi_reduction <add>, %180, %cst_77 [1] : vector<8x128xf32> to vector<8xf32>
    %182 = vector.shape_cast %181 : vector<8xf32> to vector<8x1xf32>
    %c31 = arith.constant 31 : index
    %c0_78 = arith.constant 0 : index
    %183 = vector.load %arg4[%c31, %c0_78] : memref<32x128xf32, #tpu.memory_space<vmem>>, vector<1x1xf32>
    %184 = vector.broadcast %183 : vector<1x1xf32> to vector<8x1xf32>
    %185 = arith.addf %182, %184 : vector<8x1xf32>
    %186 = arith.negf %185 : vector<8x1xf32>
    %187 = math.exp %186 : vector<8x1xf32>
    %cst_79 = arith.constant 1.000000e+00 : f32
    %188 = vector.broadcast %cst_79 : f32 to vector<8x1xf32>
    %189 = arith.addf %188, %187 : vector<8x1xf32>
    %190 = arith.divf %188, %189 : vector<8x1xf32>
    %c0_80 = arith.constant 0 : index
    %c0_81 = arith.constant 0 : index
    %191 = vector.load %arg5[%c0_80, %c0_81] : memref<8x1xf32, #tpu.memory_space<vmem>>, vector<8x1xf32>
    tpu.vector_store %arg5[%c0_80, %c0_81], %190 {strides = array<i32>} : memref<8x1xf32, #tpu.memory_space<vmem>>, vector<8x1xf32>,
    return
  }
  func.func @transform_0(%arg0: i32) -> (i32, i32) {
    %c0_i32 = arith.constant 0 : i32
    %c0_i32_0 = arith.constant 0 : i32
    return %arg0, %c0_i32 : i32, i32
  }
  func.func @transform_1(%arg0: i32) -> (i32, i32) {
    %c0_i32 = arith.constant 0 : i32
    %c0_i32_0 = arith.constant 0 : i32
    %c0_i32_1 = arith.constant 0 : i32
    return %c0_i32, %c0_i32_0 : i32, i32
  }
  func.func @transform_2(%arg0: i32) -> (i32, i32, i32) {
    %c0_i32 = arith.constant 0 : i32
    %c0_i32_0 = arith.constant 0 : i32
    %c0_i32_1 = arith.constant 0 : i32
    %c0_i32_2 = arith.constant 0 : i32
    return %c0_i32, %c0_i32_0, %c0_i32_1 : i32, i32, i32
  }
  func.func @transform_3(%arg0: i32) -> (i32, i32) {
    %c0_i32 = arith.constant 0 : i32
    %c0_i32_0 = arith.constant 0 : i32
    %c0_i32_1 = arith.constant 0 : i32
    return %c0_i32, %c0_i32_0 : i32, i32
  }
  func.func @transform_4(%arg0: i32) -> (i32, i32) {
    %c0_i32 = arith.constant 0 : i32
    %c0_i32_0 = arith.constant 0 : i32
    return %arg0, %c0_i32 : i32, i32
  }
}

</mosaic_0001>

<llo_original>
// kernel: tpu_custom_call.1
$region0: #{tpu_custom_call.1}
  #allocation0 [shape = 'u32[]', space=smem, size = 0x4, offset = 0x4, fixed_abs, tag = 'smem constant byte address 0x4 - core index']
  #allocation1 [shape = 'u32[72,128]{1,0:T(1,128)}', space=vmem, size = 0x9000, scoped, tag = 'internal scratch']
  #allocation2 [shape = 'bf16[8,2432]{1,0:T(8,128)(2,1)}', space=vmem, size = 0x9800, scoped, tag = 'scratch operand']
  %s0 = inlined_call_operand.hbm [shape: f32[8,2381], index: 0, kind: input, shape index: {}]
  %s1 = inlined_call_operand.hbm [shape: bf16[2432,128], index: 1, kind: input, shape index: {}]
  %s2 = inlined_call_operand.hbm [shape: bf16[3,128,128], index: 2, kind: input, shape index: {}]
  %s3 = inlined_call_operand.hbm [shape: f32[32,128], index: 3, kind: input, shape index: {}]
  %s4 = inlined_call_operand.vmem [shape: f32[8,1], index: 4, kind: output, shape index: {}]
  %s5 = sld [smem:[#allocation0]]
  $region42: #{tpu_custom_call.1} parent=0
    _
  %s7 = ssub.s32 1, %s5
  %s8 = scalar_select 0, %s7, %s5
  $region1: #{tpu_custom_call.1} parent=0
    #allocation3 [shape = 'u8[77824]{0}', space=vmem, size = 0x13000, scoped, tag = 'input window, operand 0, single buffered']
    #allocation4 [shape = 's32[1]{0}', space=sflag, size = 0x4, scoped, tag = 'scoped memory for tpu_custom_call.1']
    #allocation5 [shape = 'u8[622592]{0}', space=vmem, size = 0x98000, scoped, tag = 'input window, operand 1, single buffered']
    #allocation6 [shape = 's32[1]{0}', space=sflag, size = 0x4, scoped, tag = 'scoped memory for tpu_custom_call.1']
    #allocation7 [shape = 'u8[98304]{0}', space=vmem, size = 0x18000, scoped, tag = 'input window, operand 2, single buffered']
    #allocation8 [shape = 'u8[16384]{0}', space=vmem, size = 0x4000, scoped, tag = 'input window, operand 3, single buffered']
    #allocation9 [shape = 's32[1]{0}', space=sflag, size = 0x4, scoped, tag = 'scoped memory for tpu_custom_call.1']
    %9 = vsyncpa [#allocation4], 0
    %10 = vsyncpa [#allocation6], 0
    %11 = vsyncpa [#allocation9], 0
    // Predicated region
    $region2: #{tpu_custom_call.1} parent=1 // pred_check
      _
    $region3: #{tpu_custom_call.1} parent=1 // pred_check_branch
      %13 = sbr.rel (0) target = $region5
    $region4: #{tpu_custom_call.1} parent=1 // pred_region
      %15 = vsyncadd [#allocation4], 0
      %s17 = sshll.u32 %s0, 4
      %s18 = int_to_ptr.hbm [resolvable:$true] %s17
      %s19 = sshll.u32 [#allocation3], 4
      %s20 = int_to_ptr.vmem [resolvable:$true] %s19
      %22 = dma.hbm_to_vmem [thread:$0]  %s18, 2432, %s20, [#allocation4]
    $region5: #{tpu_custom_call.1} parent=1 // pred_fallthru
      _
    // Predicated region
    $region6: #{tpu_custom_call.1} parent=1 // pred_check
      _
    $region7: #{tpu_custom_call.1} parent=1 // pred_check_branch
      %24 = sbr.rel (0) target = $region9
    $region8: #{tpu_custom_call.1} parent=1 // pred_region
      %26 = vsyncadd [#allocation6], 0
      %s27 = sshll.u32 %s1, 4
      %s28 = int_to_ptr.hbm [resolvable:$true] %s27
      %s29 = sshll.u32 [#allocation5], 4
      %s30 = int_to_ptr.vmem [resolvable:$true] %s29
      %35 = dma.hbm_to_vmem [thread:$0]  %s28, 19456, %s30, [#allocation6], 64, 64, 4
    $region9: #{tpu_custom_call.1} parent=1 // pred_fallthru
      _
    // Predicated region
    $region10: #{tpu_custom_call.1} parent=1 // pred_check
      _
    $region11: #{tpu_custom_call.1} parent=1 // pred_check_branch
      %37 = sbr.rel (0) target = $region13
    $region12: #{tpu_custom_call.1} parent=1 // pred_region
      %39 = vsyncadd [#allocation6], 0
      %s40 = sshll.u32 %s2, 4
      %s41 = int_to_ptr.hbm [resolvable:$true] %s40
      %s42 = sshll.u32 [#allocation7], 4
      %s43 = int_to_ptr.vmem [resolvable:$true] %s42
      %48 = dma.hbm_to_vmem [thread:$0]  %s41, 3072, %s43, [#allocation6], 64, 64, 4
    $region13: #{tpu_custom_call.1} parent=1 // pred_fallthru
      _
    // Predicated region
    $region14: #{tpu_custom_call.1} parent=1 // pred_check
      _
    $region15: #{tpu_custom_call.1} parent=1 // pred_check_branch
      %50 = sbr.rel (0) target = $region17
    $region16: #{tpu_custom_call.1} parent=1 // pred_region
      %52 = vsyncadd [#allocation9], 0
      %s53 = sshll.u32 %s3, 4
      %s54 = int_to_ptr.hbm [resolvable:$true] %s53
      %s55 = sshll.u32 [#allocation8], 4
      %s56 = int_to_ptr.vmem [resolvable:$true] %s55
      %61 = dma.hbm_to_vmem [thread:$0]  %s54, 512, %s56, [#allocation9], 128, 128, 8
    $region17: #{tpu_custom_call.1} parent=1 // pred_fallthru
      _
    // Predicated region
    $region18: #{tpu_custom_call.1} parent=1 // pred_check
      _
    $region19: #{tpu_custom_call.1} parent=1 // pred_check_branch
      %63 = sbr.rel (0) target = $region21
    $region20: #{tpu_custom_call.1} parent=1 // pred_region
      %65 = dma.done [#allocation4], 2432
    $region21: #{tpu_custom_call.1} parent=1 // pred_fallthru
      _
    // Predicated region
    $region22: #{tpu_custom_call.1} parent=1 // pred_check
      _
    $region23: #{tpu_custom_call.1} parent=1 // pred_check_branch
      %67 = sbr.rel (0) target = $region25
    $region24: #{tpu_custom_call.1} parent=1 // pred_region
      %69 = dma.done [#allocation6], 19456
    $region25: #{tpu_custom_call.1} parent=1 // pred_fallthru
      _
    // Predicated region
    $region26: #{tpu_custom_call.1} parent=1 // pred_check
      _
    $region27: #{tpu_custom_call.1} parent=1 // pred_check_branch
      %71 = sbr.rel (0) target = $region29
    $region28: #{tpu_custom_call.1} parent=1 // pred_region
      %73 = dma.done [#allocation6], 3072
    $region29: #{tpu_custom_call.1} parent=1 // pred_fallthru
      _
    // Predicated region
    $region30: #{tpu_custom_call.1} parent=1 // pred_check
      _
    $region31: #{tpu_custom_call.1} parent=1 // pred_check_branch
      %75 = sbr.rel (0) target = $region33
    $region32: #{tpu_custom_call.1} parent=1 // pred_region
      %77 = dma.done [#allocation9], 512
    $region33: #{tpu_custom_call.1} parent=1 // pred_fallthru
      _
    %vm79 = vcmask 1044072
    %80 = vst.msk [vmem:[#allocation2 + $0x48] sm:$0xf] %vm79, 0
    %v81 = vld [vmem:[#allocation3] sm:$0xff]
    %v82 = vld [vmem:[#allocation3 + $0x8] sm:$0xff]
    %v83 = vld [vmem:[#allocation3 + $0x10] sm:$0xff]
    %v84 = vld [vmem:[#allocation3 + $0x18] sm:$0xff]
    %v85 = vld [vmem:[#allocation3 + $0x20] sm:$0xff]
    %v86 = vld [vmem:[#allocation3 + $0x28] sm:$0xff]
    %v87 = vld [vmem:[#allocation3 + $0x30] sm:$0xff]
    %v88 = vld [vmem:[#allocation3 + $0x38] sm:$0xff]
    %v89 = vld [vmem:[#allocation3 + $0x40] sm:$0xff]
    %v90 = vld [vmem:[#allocation3 + $0x48] sm:$0xff]
    %v91 = vld [vmem:[#allocation3 + $0x50] sm:$0xff]
    %v92 = vld [vmem:[#allocation3 + $0x58] sm:$0xff]
    %v93 = vld [vmem:[#allocation3 + $0x60] sm:$0xff]
    %v94 = vld [vmem:[#allocation3 + $0x68] sm:$0xff]
    %v95 = vld [vmem:[#allocation3 + $0x70] sm:$0xff]
    %v96 = vld [vmem:[#allocation3 + $0x78] sm:$0xff]
    %v97 = vld [vmem:[#allocation3 + $0x80] sm:$0xff]
    %v98 = vld [vmem:[#allocation3 + $0x88] sm:$0xff]
    %v99 = vld [vmem:[#allocation3 + $0x90] sm:$0xff]
    %v100 = vpack.c.bf16 %v82, %v81
    %v101 = vpack.c.bf16 %v84, %v83
    %v102 = vpack.c.bf16 %v86, %v85
    %v103 = vpack.c.bf16 %v88, %v87
    %v104 = vpack.c.bf16 %v90, %v89
    %v105 = vpack.c.bf16 %v92, %v91
    %v106 = vpack.c.bf16 %v94, %v93
    %v107 = vpack.c.bf16 %v96, %v95
    %v108 = vpack.c.bf16 %v98, %v97
    %v109 = vpack.c.bf16 %v99, %v99
    %110 = vst [vmem:[#allocation2] sm:$0xff] %v100
    %111 = vst [vmem:[#allocation2 + $0x8] sm:$0xff] %v101
    %112 = vst [vmem:[#allocation2 + $0x10] sm:$0xff] %v102
    %113 = vst [vmem:[#allocation2 + $0x18] sm:$0xff] %v103
    %114 = vst [vmem:[#allocation2 + $0x20] sm:$0xff] %v104
    %115 = vst [vmem:[#allocation2 + $0x28] sm:$0xff] %v105
    %116 = vst [vmem:[#allocation2 + $0x30] sm:$0xff] %v106
    %117 = vst [vmem:[#allocation2 + $0x38] sm:$0xff] %v107
    %118 = vst [vmem:[#allocation2 + $0x40] sm:$0xff] %v108
    %vm119 = vcmask 625664
    %120 = vst.msk [vmem:[#allocation2 + $0x48] sm:$0xf] %vm119, %v109
    %v121 = vld [vmem:[#allocation2] sm:$0xff]
    %v122 = vld [vmem:[#allocation2 + $0x8] sm:$0xff]
    %v123 = vld [vmem:[#allocation2 + $0x10] sm:$0xff]
    %v124 = vld [vmem:[#allocation2 + $0x18] sm:$0xff]
    %v125 = vld [vmem:[#allocation2 + $0x20] sm:$0xff]
    %v126 = vld [vmem:[#allocation2 + $0x28] sm:$0xff]
    %v127 = vld [vmem:[#allocation2 + $0x30] sm:$0xff]
    %v128 = vld [vmem:[#allocation2 + $0x38] sm:$0xff]
    %v129 = vld [vmem:[#allocation2 + $0x40] sm:$0xff]
    %v130 = vld [vmem:[#allocation2 + $0x48] sm:$0xf]
    %v131 = vld [vmem:[#allocation5] sm:$0xf]
    %v132 = vld [vmem:[#allocation5 + $0x4] sm:$0xf]
    %v133 = vld [vmem:[#allocation5 + $0x8] sm:$0xf]
    %v134 = vld [vmem:[#allocation5 + $0xc] sm:$0xf]
    %v135 = vld [vmem:[#allocation5 + $0x10] sm:$0xf]
    %v136 = vld [vmem:[#allocation5 + $0x14] sm:$0xf]
    %v137 = vld [vmem:[#allocation5 + $0x18] sm:$0xf]
    %v138 = vld [vmem:[#allocation5 + $0x1c] sm:$0xf]
    %v139 = vld [vmem:[#allocation5 + $0x20] sm:$0xf]
    %v140 = vld [vmem:[#allocation5 + $0x24] sm:$0xf]
    %v141 = vld [vmem:[#allocation5 + $0x28] sm:$0xf]
    %v142 = vld [vmem:[#allocation5 + $0x2c] sm:$0xf]
    %v143 = vld [vmem:[#allocation5 + $0x30] sm:$0xf]
    %v144 = vld [vmem:[#allocation5 + $0x34] sm:$0xf]
    %v145 = vld [vmem:[#allocation5 + $0x38] sm:$0xf]
    %v146 = vld [vmem:[#allocation5 + $0x3c] sm:$0xf]
    %v147 = vld [vmem:[#allocation5 + $0x40] sm:$0xf]
    %v148 = vld [vmem:[#allocation5 + $0x44] sm:$0xf]
    %v149 = vld [vmem:[#allocation5 + $0x48] sm:$0xf]
    %v150 = vld [vmem:[#allocation5 + $0x4c] sm:$0xf]
    %v151 = vld [vmem:[#allocation5 + $0x50] sm:$0xf]
    %v152 = vld [vmem:[#allocation5 + $0x54] sm:$0xf]
    %v153 = vld [vmem:[#allocation5 + $0x58] sm:$0xf]
    %v154 = vld [vmem:[#allocation5 + $0x5c] sm:$0xf]
    %v155 = vld [vmem:[#allocation5 + $0x60] sm:$0xf]
    %v156 = vld [vmem:[#allocation5 + $0x64] sm:$0xf]
    %v157 = vld [vmem:[#allocation5 + $0x68] sm:$0xf]
    %v158 = vld [vmem:[#allocation5 + $0x6c] sm:$0xf]
    %v159 = vld [vmem:[#allocation5 + $0x70] sm:$0xf]
    %v160 = vld [vmem:[#allocation5 + $0x74] sm:$0xf]
    %v161 = vld [vmem:[#allocation5 + $0x78] sm:$0xf]
    %v162 = vld [vmem:[#allocation5 + $0x7c] sm:$0xf]
    %v163 = vld [vmem:[#allocation5 + $0x80] sm:$0xf]
    %v164 = vld [vmem:[#allocation5 + $0x84] sm:$0xf]
    %v165 = vld [vmem:[#allocation5 + $0x88] sm:$0xf]
    %v166 = vld [vmem:[#allocation5 + $0x8c] sm:$0xf]
    %v167 = vld [vmem:[#allocation5 + $0x90] sm:$0xf]
    %v168 = vld [vmem:[#allocation5 + $0x94] sm:$0xf]
    %v169 = vld [vmem:[#allocation5 + $0x98] sm:$0xf]
    %v170 = vld [vmem:[#allocation5 + $0x9c] sm:$0xf]
    %v171 = vld [vmem:[#allocation5 + $0xa0] sm:$0xf]
    %v172 = vld [vmem:[#allocation5 + $0xa4] sm:$0xf]
    %v173 = vld [vmem:[#allocation5 + $0xa8] sm:$0xf]
    %v174 = vld [vmem:[#allocation5 + $0xac] sm:$0xf]
    %v175 = vld [vmem:[#allocation5 + $0xb0] sm:$0xf]
    %v176 = vld [vmem:[#allocation5 + $0xb4] sm:$0xf]
    %v177 = vld [vmem:[#allocation5 + $0xb8] sm:$0xf]
    %v178 = vld [vmem:[#allocation5 + $0xbc] sm:$0xf]
    %v179 = vld [vmem:[#allocation5 + $0xc0] sm:$0xf]
    %v180 = vld [vmem:[#allocation5 + $0xc4] sm:$0xf]
    %v181 = vld [vmem:[#allocation5 + $0xc8] sm:$0xf]
    %v182 = vld [vmem:[#allocation5 + $0xcc] sm:$0xf]
    %v183 = vld [vmem:[#allocation5 + $0xd0] sm:$0xf]
    %v184 = vld [vmem:[#allocation5 + $0xd4] sm:$0xf]
    %v185 = vld [vmem:[#allocation5 + $0xd8] sm:$0xf]
    %v186 = vld [vmem:[#allocation5 + $0xdc] sm:$0xf]
    %v187 = vld [vmem:[#allocation5 + $0xe0] sm:$0xf]
    %v188 = vld [vmem:[#allocation5 + $0xe4] sm:$0xf]
    %v189 = vld [vmem:[#allocation5 + $0xe8] sm:$0xf]
    %v190 = vld [vmem:[#allocation5 + $0xec] sm:$0xf]
    %v191 = vld [vmem:[#allocation5 + $0xf0] sm:$0xf]
    %v192 = vld [vmem:[#allocation5 + $0xf4] sm:$0xf]
    %v193 = vld [vmem:[#allocation5 + $0xf8] sm:$0xf]
    %v194 = vld [vmem:[#allocation5 + $0xfc] sm:$0xf]
    %v195 = vld [vmem:[#allocation5 + $0x100] sm:$0xf]
    %v196 = vld [vmem:[#allocation5 + $0x104] sm:$0xf]
    %v197 = vld [vmem:[#allocation5 + $0x108] sm:$0xf]
    %v198 = vld [vmem:[#allocation5 + $0x10c] sm:$0xf]
    %v199 = vld [vmem:[#allocation5 + $0x110] sm:$0xf]
    %v200 = vld [vmem:[#allocation5 + $0x114] sm:$0xf]
    %v201 = vld [vmem:[#allocation5 + $0x118] sm:$0xf]
    %v202 = vld [vmem:[#allocation5 + $0x11c] sm:$0xf]
    %v203 = vld [vmem:[#allocation5 + $0x120] sm:$0xf]
    %v204 = vld [vmem:[#allocation5 + $0x124] sm:$0xf]
    %v205 = vld [vmem:[#allocation5 + $0x128] sm:$0xf]
    %v206 = vld [vmem:[#allocation5 + $0x12c] sm:$0xf]
    %v207 = vld [vmem:[#allocation5 + $0x130] sm:$0xf]
    %v208 = vld [vmem:[#allocation5 + $0x134] sm:$0xf]
    %v209 = vld [vmem:[#allocation5 + $0x138] sm:$0xf]
    %v210 = vld [vmem:[#allocation5 + $0x13c] sm:$0xf]
    %v211 = vld [vmem:[#allocation5 + $0x140] sm:$0xf]
    %v212 = vld [vmem:[#allocation5 + $0x144] sm:$0xf]
    %v213 = vld [vmem:[#allocation5 + $0x148] sm:$0xf]
    %v214 = vld [vmem:[#allocation5 + $0x14c] sm:$0xf]
    %v215 = vld [vmem:[#allocation5 + $0x150] sm:$0xf]
    %v216 = vld [vmem:[#allocation5 + $0x154] sm:$0xf]
    %v217 = vld [vmem:[#allocation5 + $0x158] sm:$0xf]
    %v218 = vld [vmem:[#allocation5 + $0x15c] sm:$0xf]
    %v219 = vld [vmem:[#allocation5 + $0x160] sm:$0xf]
    %v220 = vld [vmem:[#allocation5 + $0x164] sm:$0xf]
    %v221 = vld [vmem:[#allocation5 + $0x168] sm:$0xf]
    %v222 = vld [vmem:[#allocation5 + $0x16c] sm:$0xf]
    %v223 = vld [vmem:[#allocation5 + $0x170] sm:$0xf]
    %v224 = vld [vmem:[#allocation5 + $0x174] sm:$0xf]
    %v225 = vld [vmem:[#allocation5 + $0x178] sm:$0xf]
    %v226 = vld [vmem:[#allocation5 + $0x17c] sm:$0xf]
    %v227 = vld [vmem:[#allocation5 + $0x180] sm:$0xf]
    %v228 = vld [vmem:[#allocation5 + $0x184] sm:$0xf]
    %v229 = vld [vmem:[#allocation5 + $0x188] sm:$0xf]
    %v230 = vld [vmem:[#allocation5 + $0x18c] sm:$0xf]
    %v231 = vld [vmem:[#allocation5 + $0x190] sm:$0xf]
    %v232 = vld [vmem:[#allocation5 + $0x194] sm:$0xf]
    %v233 = vld [vmem:[#allocation5 + $0x198] sm:$0xf]
    %v234 = vld [vmem:[#allocation5 + $0x19c] sm:$0xf]
    %v235 = vld [vmem:[#allocation5 + $0x1a0] sm:$0xf]
    %v236 = vld [vmem:[#allocation5 + $0x1a4] sm:$0xf]
    %v237 = vld [vmem:[#allocation5 + $0x1a8] sm:$0xf]
    %v238 = vld [vmem:[#allocation5 + $0x1ac] sm:$0xf]
    %v239 = vld [vmem:[#allocation5 + $0x1b0] sm:$0xf]
    %v240 = vld [vmem:[#allocation5 + $0x1b4] sm:$0xf]
    %v241 = vld [vmem:[#allocation5 + $0x1b8] sm:$0xf]
    %v242 = vld [vmem:[#allocation5 + $0x1bc] sm:$0xf]
    %v243 = vld [vmem:[#allocation5 + $0x1c0] sm:$0xf]
    %v244 = vld [vmem:[#allocation5 + $0x1c4] sm:$0xf]
    %v245 = vld [vmem:[#allocation5 + $0x1c8] sm:$0xf]
    %v246 = vld [vmem:[#allocation5 + $0x1cc] sm:$0xf]
    %v247 = vld [vmem:[#allocation5 + $0x1d0] sm:$0xf]
    %v248 = vld [vmem:[#allocation5 + $0x1d4] sm:$0xf]
    %v249 = vld [vmem:[#allocation5 + $0x1d8] sm:$0xf]
    %v250 = vld [vmem:[#allocation5 + $0x1dc] sm:$0xf]
    %v251 = vld [vmem:[#allocation5 + $0x1e0] sm:$0xf]
    %v252 = vld [vmem:[#allocation5 + $0x1e4] sm:$0xf]
    %v253 = vld [vmem:[#allocation5 + $0x1e8] sm:$0xf]
    %v254 = vld [vmem:[#allocation5 + $0x1ec] sm:$0xf]
    %v255 = vld [vmem:[#allocation5 + $0x1f0] sm:$0xf]
    %v256 = vld [vmem:[#allocation5 + $0x1f4] sm:$0xf]
    %v257 = vld [vmem:[#allocation5 + $0x1f8] sm:$0xf]
    %v258 = vld [vmem:[#allocation5 + $0x1fc] sm:$0xf]
    %v259 = vld [vmem:[#allocation5 + $0x200] sm:$0xf]
    %v260 = vld [vmem:[#allocation5 + $0x204] sm:$0xf]
    %v261 = vld [vmem:[#allocation5 + $0x208] sm:$0xf]
    %v262 = vld [vmem:[#allocation5 + $0x20c] sm:$0xf]
    %v263 = vld [vmem:[#allocation5 + $0x210] sm:$0xf]
    %v264 = vld [vmem:[#allocation5 + $0x214] sm:$0xf]
    %v265 = vld [vmem:[#allocation5 + $0x218] sm:$0xf]
    %v266 = vld [vmem:[#allocation5 + $0x21c] sm:$0xf]
    %v267 = vld [vmem:[#allocation5 + $0x220] sm:$0xf]
    %v268 = vld [vmem:[#allocation5 + $0x224] sm:$0xf]
    %v269 = vld [vmem:[#allocation5 + $0x228] sm:$0xf]
    %v270 = vld [vmem:[#allocation5 + $0x22c] sm:$0xf]
    %v271 = vld [vmem:[#allocation5 + $0x230] sm:$0xf]
    %v272 = vld [vmem:[#allocation5 + $0x234] sm:$0xf]
    %v273 = vld [vmem:[#allocation5 + $0x238] sm:$0xf]
    %v274 = vld [vmem:[#allocation5 + $0x23c] sm:$0xf]
    %v275 = vld [vmem:[#allocation5 + $0x240] sm:$0xf]
    %v276 = vld [vmem:[#allocation5 + $0x244] sm:$0xf]
    %v277 = vld [vmem:[#allocation5 + $0x248] sm:$0xf]
    %v278 = vld [vmem:[#allocation5 + $0x24c] sm:$0xf]
    %v279 = vld [vmem:[#allocation5 + $0x250] sm:$0xf]
    %v280 = vld [vmem:[#allocation5 + $0x254] sm:$0xf]
    %v281 = vld [vmem:[#allocation5 + $0x258] sm:$0xf]
    %v282 = vld [vmem:[#allocation5 + $0x25c] sm:$0xf]
    %v283 = vld [vmem:[#allocation5 + $0x260] sm:$0xf]
    %v284 = vld [vmem:[#allocation5 + $0x264] sm:$0xf]
    %v285 = vld [vmem:[#allocation5 + $0x268] sm:$0xf]
    %v286 = vld [vmem:[#allocation5 + $0x26c] sm:$0xf]
    %v287 = vld [vmem:[#allocation5 + $0x270] sm:$0xf]
    %v288 = vld [vmem:[#allocation5 + $0x274] sm:$0xf]
    %v289 = vld [vmem:[#allocation5 + $0x278] sm:$0xf]
    %v290 = vld [vmem:[#allocation5 + $0x27c] sm:$0xf]
    %v291 = vld [vmem:[#allocation5 + $0x280] sm:$0xf]
    %v292 = vld [vmem:[#allocation5 + $0x284] sm:$0xf]
    %v293 = vld [vmem:[#allocation5 + $0x288] sm:$0xf]
    %v294 = vld [vmem:[#allocation5 + $0x28c] sm:$0xf]
    %v295 = vld [vmem:[#allocation5 + $0x290] sm:$0xf]
    %v296 = vld [vmem:[#allocation5 + $0x294] sm:$0xf]
    %v297 = vld [vmem:[#allocation5 + $0x298] sm:$0xf]
    %v298 = vld [vmem:[#allocation5 + $0x29c] sm:$0xf]
    %v299 = vld [vmem:[#allocation5 + $0x2a0] sm:$0xf]
    %v300 = vld [vmem:[#allocation5 + $0x2a4] sm:$0xf]
    %v301 = vld [vmem:[#allocation5 + $0x2a8] sm:$0xf]
    %v302 = vld [vmem:[#allocation5 + $0x2ac] sm:$0xf]
    %v303 = vld [vmem:[#allocation5 + $0x2b0] sm:$0xf]
    %v304 = vld [vmem:[#allocation5 + $0x2b4] sm:$0xf]
    %v305 = vld [vmem:[#allocation5 + $0x2b8] sm:$0xf]
    %v306 = vld [vmem:[#allocation5 + $0x2bc] sm:$0xf]
    %v307 = vld [vmem:[#allocation5 + $0x2c0] sm:$0xf]
    %v308 = vld [vmem:[#allocation5 + $0x2c4] sm:$0xf]
    %v309 = vld [vmem:[#allocation5 + $0x2c8] sm:$0xf]
    %v310 = vld [vmem:[#allocation5 + $0x2cc] sm:$0xf]
    %v311 = vld [vmem:[#allocation5 + $0x2d0] sm:$0xf]
    %v312 = vld [vmem:[#allocation5 + $0x2d4] sm:$0xf]
    %v313 = vld [vmem:[#allocation5 + $0x2d8] sm:$0xf]
    %v314 = vld [vmem:[#allocation5 + $0x2dc] sm:$0xf]
    %v315 = vld [vmem:[#allocation5 + $0x2e0] sm:$0xf]
    %v316 = vld [vmem:[#allocation5 + $0x2e4] sm:$0xf]
    %v317 = vld [vmem:[#allocation5 + $0x2e8] sm:$0xf]
    %v318 = vld [vmem:[#allocation5 + $0x2ec] sm:$0xf]
    %v319 = vld [vmem:[#allocation5 + $0x2f0] sm:$0xf]
    %v320 = vld [vmem:[#allocation5 + $0x2f4] sm:$0xf]
    %v321 = vld [vmem:[#allocation5 + $0x2f8] sm:$0xf]
    %v322 = vld [vmem:[#allocation5 + $0x2fc] sm:$0xf]
    %v323 = vld [vmem:[#allocation5 + $0x300] sm:$0xf]
    %v324 = vld [vmem:[#allocation5 + $0x304] sm:$0xf]
    %v325 = vld [vmem:[#allocation5 + $0x308] sm:$0xf]
    %v326 = vld [vmem:[#allocation5 + $0x30c] sm:$0xf]
    %v327 = vld [vmem:[#allocation5 + $0x310] sm:$0xf]
    %v328 = vld [vmem:[#allocation5 + $0x314] sm:$0xf]
    %v329 = vld [vmem:[#allocation5 + $0x318] sm:$0xf]
    %v330 = vld [vmem:[#allocation5 + $0x31c] sm:$0xf]
    %v331 = vld [vmem:[#allocation5 + $0x320] sm:$0xf]
    %v332 = vld [vmem:[#allocation5 + $0x324] sm:$0xf]
    %v333 = vld [vmem:[#allocation5 + $0x328] sm:$0xf]
    %v334 = vld [vmem:[#allocation5 + $0x32c] sm:$0xf]
    %v335 = vld [vmem:[#allocation5 + $0x330] sm:$0xf]
    %v336 = vld [vmem:[#allocation5 + $0x334] sm:$0xf]
    %v337 = vld [vmem:[#allocation5 + $0x338] sm:$0xf]
    %v338 = vld [vmem:[#allocation5 + $0x33c] sm:$0xf]
    %v339 = vld [vmem:[#allocation5 + $0x340] sm:$0xf]
    %v340 = vld [vmem:[#allocation5 + $0x344] sm:$0xf]
    %v341 = vld [vmem:[#allocation5 + $0x348] sm:$0xf]
    %v342 = vld [vmem:[#allocation5 + $0x34c] sm:$0xf]
    %v343 = vld [vmem:[#allocation5 + $0x350] sm:$0xf]
    %v344 = vld [vmem:[#allocation5 + $0x354] sm:$0xf]
    %v345 = vld [vmem:[#allocation5 + $0x358] sm:$0xf]
    %v346 = vld [vmem:[#allocation5 + $0x35c] sm:$0xf]
    %v347 = vld [vmem:[#allocation5 + $0x360] sm:$0xf]
    %v348 = vld [vmem:[#allocation5 + $0x364] sm:$0xf]
    %v349 = vld [vmem:[#allocation5 + $0x368] sm:$0xf]
    %v350 = vld [vmem:[#allocation5 + $0x36c] sm:$0xf]
    %v351 = vld [vmem:[#allocation5 + $0x370] sm:$0xf]
    %v352 = vld [vmem:[#allocation5 + $0x374] sm:$0xf]
    %v353 = vld [vmem:[#allocation5 + $0x378] sm:$0xf]
    %v354 = vld [vmem:[#allocation5 + $0x37c] sm:$0xf]
    %v355 = vld [vmem:[#allocation5 + $0x380] sm:$0xf]
    %v356 = vld [vmem:[#allocation5 + $0x384] sm:$0xf]
    %v357 = vld [vmem:[#allocation5 + $0x388] sm:$0xf]
    %v358 = vld [vmem:[#allocation5 + $0x38c] sm:$0xf]
    %v359 = vld [vmem:[#allocation5 + $0x390] sm:$0xf]
    %v360 = vld [vmem:[#allocation5 + $0x394] sm:$0xf]
    %v361 = vld [vmem:[#allocation5 + $0x398] sm:$0xf]
    %v362 = vld [vmem:[#allocation5 + $0x39c] sm:$0xf]
    %v363 = vld [vmem:[#allocation5 + $0x3a0] sm:$0xf]
    %v364 = vld [vmem:[#allocation5 + $0x3a4] sm:$0xf]
    %v365 = vld [vmem:[#allocation5 + $0x3a8] sm:$0xf]
    %v366 = vld [vmem:[#allocation5 + $0x3ac] sm:$0xf]
    %v367 = vld [vmem:[#allocation5 + $0x3b0] sm:$0xf]
    %v368 = vld [vmem:[#allocation5 + $0x3b4] sm:$0xf]
    %v369 = vld [vmem:[#allocation5 + $0x3b8] sm:$0xf]
    %v370 = vld [vmem:[#allocation5 + $0x3bc] sm:$0xf]
    %v371 = vld [vmem:[#allocation5 + $0x3c0] sm:$0xf]
    %v372 = vld [vmem:[#allocation5 + $0x3c4] sm:$0xf]
    %v373 = vld [vmem:[#allocation5 + $0x3c8] sm:$0xf]
    %v374 = vld [vmem:[#allocation5 + $0x3cc] sm:$0xf]
    %v375 = vld [vmem:[#allocation5 + $0x3d0] sm:$0xf]
    %v376 = vld [vmem:[#allocation5 + $0x3d4] sm:$0xf]
    %v377 = vld [vmem:[#allocation5 + $0x3d8] sm:$0xf]
    %v378 = vld [vmem:[#allocation5 + $0x3dc] sm:$0xf]
    %v379 = vld [vmem:[#allocation5 + $0x3e0] sm:$0xf]
    %v380 = vld [vmem:[#allocation5 + $0x3e4] sm:$0xf]
    %v381 = vld [vmem:[#allocation5 + $0x3e8] sm:$0xf]
    %v382 = vld [vmem:[#allocation5 + $0x3ec] sm:$0xf]
    %v383 = vld [vmem:[#allocation5 + $0x3f0] sm:$0xf]
    %v384 = vld [vmem:[#allocation5 + $0x3f4] sm:$0xf]
    %v385 = vld [vmem:[#allocation5 + $0x3f8] sm:$0xf]
    %v386 = vld [vmem:[#allocation5 + $0x3fc] sm:$0xf]
    %v387 = vld [vmem:[#allocation5 + $0x400] sm:$0xf]
    %v388 = vld [vmem:[#allocation5 + $0x404] sm:$0xf]
    %v389 = vld [vmem:[#allocation5 + $0x408] sm:$0xf]
    %v390 = vld [vmem:[#allocation5 + $0x40c] sm:$0xf]
    %v391 = vld [vmem:[#allocation5 + $0x410] sm:$0xf]
    %v392 = vld [vmem:[#allocation5 + $0x414] sm:$0xf]
    %v393 = vld [vmem:[#allocation5 + $0x418] sm:$0xf]
    %v394 = vld [vmem:[#allocation5 + $0x41c] sm:$0xf]
    %v395 = vld [vmem:[#allocation5 + $0x420] sm:$0xf]
    %v396 = vld [vmem:[#allocation5 + $0x424] sm:$0xf]
    %v397 = vld [vmem:[#allocation5 + $0x428] sm:$0xf]
    %v398 = vld [vmem:[#allocation5 + $0x42c] sm:$0xf]
    %v399 = vld [vmem:[#allocation5 + $0x430] sm:$0xf]
    %v400 = vld [vmem:[#allocation5 + $0x434] sm:$0xf]
    %v401 = vld [vmem:[#allocation5 + $0x438] sm:$0xf]
    %v402 = vld [vmem:[#allocation5 + $0x43c] sm:$0xf]
    %v403 = vld [vmem:[#allocation5 + $0x440] sm:$0xf]
    %v404 = vld [vmem:[#allocation5 + $0x444] sm:$0xf]
    %v405 = vld [vmem:[#allocation5 + $0x448] sm:$0xf]
    %v406 = vld [vmem:[#allocation5 + $0x44c] sm:$0xf]
    %v407 = vld [vmem:[#allocation5 + $0x450] sm:$0xf]
    %v408 = vld [vmem:[#allocation5 + $0x454] sm:$0xf]
    %v409 = vld [vmem:[#allocation5 + $0x458] sm:$0xf]
    %v410 = vld [vmem:[#allocation5 + $0x45c] sm:$0xf]
    %v411 = vld [vmem:[#allocation5 + $0x460] sm:$0xf]
    %v412 = vld [vmem:[#allocation5 + $0x464] sm:$0xf]
    %v413 = vld [vmem:[#allocation5 + $0x468] sm:$0xf]
    %v414 = vld [vmem:[#allocation5 + $0x46c] sm:$0xf]
    %v415 = vld [vmem:[#allocation5 + $0x470] sm:$0xf]
    %v416 = vld [vmem:[#allocation5 + $0x474] sm:$0xf]
    %v417 = vld [vmem:[#allocation5 + $0x478] sm:$0xf]
    %v418 = vld [vmem:[#allocation5 + $0x47c] sm:$0xf]
    %v419 = vld [vmem:[#allocation5 + $0x480] sm:$0xf]
    %v420 = vld [vmem:[#allocation5 + $0x484] sm:$0xf]
    %v421 = vld [vmem:[#allocation5 + $0x488] sm:$0xf]
    %v422 = vld [vmem:[#allocation5 + $0x48c] sm:$0xf]
    %v423 = vld [vmem:[#allocation5 + $0x490] sm:$0xf]
    %v424 = vld [vmem:[#allocation5 + $0x494] sm:$0xf]
    %v425 = vld [vmem:[#allocation5 + $0x498] sm:$0xf]
    %v426 = vld [vmem:[#allocation5 + $0x49c] sm:$0xf]
    %v427 = vld [vmem:[#allocation5 + $0x4a0] sm:$0xf]
    %v428 = vld [vmem:[#allocation5 + $0x4a4] sm:$0xf]
    %v429 = vld [vmem:[#allocation5 + $0x4a8] sm:$0xf]
    %v430 = vld [vmem:[#allocation5 + $0x4ac] sm:$0xf]
    %v431 = vld [vmem:[#allocation5 + $0x4b0] sm:$0xf]
    %v432 = vld [vmem:[#allocation5 + $0x4b4] sm:$0xf]
    %v433 = vld [vmem:[#allocation5 + $0x4b8] sm:$0xf]
    %v434 = vld [vmem:[#allocation5 + $0x4bc] sm:$0xf]
    %v435 = vld [vmem:[#allocation8] sm:$0x1]
    %v436 = vperm.slane %v435, 0
    %v447 = vunpack.c.l.b16 %v121
    %v448 = vunpack.c.h.b16 %v121
    %v449 = vunpack.c.l.b16 %v122
    %v450 = vunpack.c.h.b16 %v122
    %v451 = vunpack.c.l.b16 %v123
    %v452 = vunpack.c.h.b16 %v123
    %v453 = vunpack.c.l.b16 %v124
    %v454 = vunpack.c.h.b16 %v124
    %v455 = vunpack.c.l.b16 %v125
    %v456 = vunpack.c.h.b16 %v125
    %v457 = vunpack.c.l.b16 %v126
    %v458 = vunpack.c.h.b16 %v126
    %v459 = vunpack.c.l.b16 %v127
    %v460 = vunpack.c.h.b16 %v127
    %v461 = vunpack.c.l.b16 %v128
    %v462 = vunpack.c.h.b16 %v128
    %v463 = vunpack.c.l.b16 %v129
    %v464 = vunpack.c.h.b16 %v129
    %v465 = vunpack.c.l.b16 %v130
    %v466 = vpack.c.b16 %v447, %v447
    %v467 = vpack.c.b16 %v448, %v448
    %v468 = vpack.c.b16 %v449, %v449
    %v469 = vpack.c.b16 %v450, %v450
    %v470 = vpack.c.b16 %v451, %v451
    %v471 = vpack.c.b16 %v452, %v452
    %v472 = vpack.c.b16 %v453, %v453
    %v473 = vpack.c.b16 %v454, %v454
    %v474 = vpack.c.b16 %v455, %v455
    %v475 = vpack.c.b16 %v456, %v456
    %v476 = vpack.c.b16 %v457, %v457
    %v477 = vpack.c.b16 %v458, %v458
    %v478 = vpack.c.b16 %v459, %v459
    %v479 = vpack.c.b16 %v460, %v460
    %v480 = vpack.c.b16 %v461, %v461
    %v481 = vpack.c.b16 %v462, %v462
    %v482 = vpack.c.b16 %v463, %v463
    %v483 = vpack.c.b16 %v464, %v464
    %v484 = vpack.c.b16 %v465, %v465
    %v808 = vunpack.c.l.b16 %v131
    %v809 = vunpack.c.l.b16 %v132
    %v810 = vunpack.c.l.b16 %v133
    %v811 = vunpack.c.l.b16 %v134
    %v812 = vunpack.c.l.b16 %v135
    %v813 = vunpack.c.l.b16 %v136
    %v814 = vunpack.c.l.b16 %v137
    %v815 = vunpack.c.l.b16 %v138
    %v816 = vunpack.c.l.b16 %v139
    %v817 = vunpack.c.l.b16 %v140
    %v818 = vunpack.c.l.b16 %v141
    %v819 = vunpack.c.l.b16 %v142
    %v820 = vunpack.c.l.b16 %v143
    %v821 = vunpack.c.l.b16 %v144
    %v822 = vunpack.c.l.b16 %v145
    %v823 = vunpack.c.l.b16 %v146
    %v824 = vunpack.c.l.b16 %v147
    %v825 = vunpack.c.l.b16 %v148
    %v826 = vunpack.c.l.b16 %v149
    %v827 = vunpack.c.l.b16 %v150
    %v828 = vunpack.c.l.b16 %v151
    %v829 = vunpack.c.l.b16 %v152
    %v830 = vunpack.c.l.b16 %v153
    %v831 = vunpack.c.l.b16 %v154
    %v832 = vunpack.c.l.b16 %v155
    %v833 = vunpack.c.l.b16 %v156
    %v834 = vunpack.c.l.b16 %v157
    %v835 = vunpack.c.l.b16 %v158
    %v836 = vunpack.c.l.b16 %v159
    %v837 = vunpack.c.l.b16 %v160
    %v838 = vunpack.c.l.b16 %v161
    %v839 = vunpack.c.l.b16 %v162
    %v840 = vunpack.c.l.b16 %v163
    %v841 = vunpack.c.l.b16 %v164
    %v842 = vunpack.c.l.b16 %v165
    %v843 = vunpack.c.l.b16 %v166
    %v844 = vunpack.c.l.b16 %v167
    %v845 = vunpack.c.l.b16 %v168
    %v846 = vunpack.c.l.b16 %v169
    %v847 = vunpack.c.l.b16 %v170
    %v848 = vunpack.c.l.b16 %v171
    %v849 = vunpack.c.l.b16 %v172
    %v850 = vunpack.c.l.b16 %v173
    %v851 = vunpack.c.l.b16 %v174
    %v852 = vunpack.c.l.b16 %v175
    %v853 = vunpack.c.l.b16 %v176
    %v854 = vunpack.c.l.b16 %v177
    %v855 = vunpack.c.l.b16 %v178
    %v856 = vunpack.c.l.b16 %v179
    %v857 = vunpack.c.l.b16 %v180
    %v858 = vunpack.c.l.b16 %v181
    %v859 = vunpack.c.l.b16 %v182
    %v860 = vunpack.c.l.b16 %v183
    %v861 = vunpack.c.l.b16 %v184
    %v862 = vunpack.c.l.b16 %v185
    %v863 = vunpack.c.l.b16 %v186
    %v864 = vunpack.c.l.b16 %v187
    %v865 = vunpack.c.l.b16 %v188
    %v866 = vunpack.c.l.b16 %v189
    %v867 = vunpack.c.l.b16 %v190
    %v868 = vunpack.c.l.b16 %v191
    %v869 = vunpack.c.l.b16 %v192
    %v870 = vunpack.c.l.b16 %v193
    %v871 = vunpack.c.l.b16 %v194
    %v872 = vunpack.c.l.b16 %v195
    %v873 = vunpack.c.l.b16 %v196
    %v874 = vunpack.c.l.b16 %v197
    %v875 = vunpack.c.l.b16 %v198
    %v876 = vunpack.c.l.b16 %v199
    %v877 = vunpack.c.l.b16 %v200
    %v878 = vunpack.c.l.b16 %v201
    %v879 = vunpack.c.l.b16 %v202
    %v880 = vunpack.c.l.b16 %v203
    %v881 = vunpack.c.l.b16 %v204
    %v882 = vunpack.c.l.b16 %v205
    %v883 = vunpack.c.l.b16 %v206
    %v884 = vunpack.c.l.b16 %v207
    %v885 = vunpack.c.l.b16 %v208
    %v886 = vunpack.c.l.b16 %v209
    %v887 = vunpack.c.l.b16 %v210
    %v888 = vunpack.c.l.b16 %v211
    %v889 = vunpack.c.l.b16 %v212
    %v890 = vunpack.c.l.b16 %v213
    %v891 = vunpack.c.l.b16 %v214
    %v892 = vunpack.c.l.b16 %v215
    %v893 = vunpack.c.l.b16 %v216
    %v894 = vunpack.c.l.b16 %v217
    %v895 = vunpack.c.l.b16 %v218
    %v896 = vunpack.c.l.b16 %v219
    %v897 = vunpack.c.l.b16 %v220
    %v898 = vunpack.c.l.b16 %v221
    %v899 = vunpack.c.l.b16 %v222
    %v900 = vunpack.c.l.b16 %v223
    %v901 = vunpack.c.l.b16 %v224
    %v902 = vunpack.c.l.b16 %v225
    %v903 = vunpack.c.l.b16 %v226
    %v904 = vunpack.c.l.b16 %v227
    %v905 = vunpack.c.l.b16 %v228
    %v906 = vunpack.c.l.b16 %v229
    %v907 = vunpack.c.l.b16 %v230
    %v908 = vunpack.c.l.b16 %v231
    %v909 = vunpack.c.l.b16 %v232
    %v910 = vunpack.c.l.b16 %v233
    %v911 = vunpack.c.l.b16 %v234
    %v912 = vunpack.c.l.b16 %v235
    %v913 = vunpack.c.l.b16 %v236
    %v914 = vunpack.c.l.b16 %v237
    %v915 = vunpack.c.l.b16 %v238
    %v916 = vunpack.c.l.b16 %v239
    %v917 = vunpack.c.l.b16 %v240
    %v918 = vunpack.c.l.b16 %v241
    %v919 = vunpack.c.l.b16 %v242
    %v920 = vunpack.c.l.b16 %v243
    %v921 = vunpack.c.l.b16 %v244
    %v922 = vunpack.c.l.b16 %v245
    %v923 = vunpack.c.l.b16 %v246
    %v924 = vunpack.c.l.b16 %v247
    %v925 = vunpack.c.l.b16 %v248
    %v926 = vunpack.c.l.b16 %v249
    %v927 = vunpack.c.l.b16 %v250
    %v928 = vunpack.c.l.b16 %v251
    %v929 = vunpack.c.l.b16 %v252
    %v930 = vunpack.c.l.b16 %v253
    %v931 = vunpack.c.l.b16 %v254
    %v932 = vunpack.c.l.b16 %v255
    %v933 = vunpack.c.l.b16 %v256
    %v934 = vunpack.c.l.b16 %v257
    %v935 = vunpack.c.l.b16 %v258
    %v936 = vunpack.c.l.b16 %v259
    %v937 = vunpack.c.l.b16 %v260
    %v938 = vunpack.c.l.b16 %v261
    %v939 = vunpack.c.l.b16 %v262
    %v940 = vunpack.c.l.b16 %v263
    %v941 = vunpack.c.l.b16 %v264
    %v942 = vunpack.c.l.b16 %v265
    %v943 = vunpack.c.l.b16 %v266
    %v944 = vunpack.c.l.b16 %v267
    %v945 = vunpack.c.l.b16 %v268
    %v946 = vunpack.c.l.b16 %v269
    %v947 = vunpack.c.l.b16 %v270
    %v948 = vunpack.c.l.b16 %v271
    %v949 = vunpack.c.l.b16 %v272
    %v950 = vunpack.c.l.b16 %v273
    %v951 = vunpack.c.l.b16 %v274
    %v952 = vunpack.c.l.b16 %v275
    %v953 = vunpack.c.l.b16 %v276
    %v954 = vunpack.c.l.b16 %v277
    %v955 = vunpack.c.l.b16 %v278
    %v956 = vunpack.c.l.b16 %v279
    %v957 = vunpack.c.l.b16 %v280
    %v958 = vunpack.c.l.b16 %v281
    %v959 = vunpack.c.l.b16 %v282
    %v960 = vunpack.c.l.b16 %v283
    %v961 = vunpack.c.l.b16 %v284
    %v962 = vunpack.c.l.b16 %v285
    %v963 = vunpack.c.l.b16 %v286
    %v964 = vunpack.c.l.b16 %v287
    %v965 = vunpack.c.l.b16 %v288
    %v966 = vunpack.c.l.b16 %v289
    %v967 = vunpack.c.l.b16 %v290
    %v968 = vunpack.c.l.b16 %v291
    %v969 = vunpack.c.l.b16 %v292
    %v970 = vunpack.c.l.b16 %v293
    %v971 = vunpack.c.l.b16 %v294
    %v972 = vunpack.c.l.b16 %v295
    %v973 = vunpack.c.l.b16 %v296
    %v974 = vunpack.c.l.b16 %v297
    %v975 = vunpack.c.l.b16 %v298
    %v976 = vunpack.c.l.b16 %v299
    %v977 = vunpack.c.l.b16 %v300
    %v978 = vunpack.c.l.b16 %v301
    %v979 = vunpack.c.l.b16 %v302
    %v980 = vunpack.c.l.b16 %v303
    %v981 = vunpack.c.l.b16 %v304
    %v982 = vunpack.c.l.b16 %v305
    %v983 = vunpack.c.l.b16 %v306
    %v984 = vunpack.c.l.b16 %v307
    %v985 = vunpack.c.l.b16 %v308
    %v986 = vunpack.c.l.b16 %v309
    %v987 = vunpack.c.l.b16 %v310
    %v988 = vunpack.c.l.b16 %v311
    %v989 = vunpack.c.l.b16 %v312
    %v990 = vunpack.c.l.b16 %v313
    %v991 = vunpack.c.l.b16 %v314
    %v992 = vunpack.c.l.b16 %v315
    %v993 = vunpack.c.l.b16 %v316
    %v994 = vunpack.c.l.b16 %v317
    %v995 = vunpack.c.l.b16 %v318
    %v996 = vunpack.c.l.b16 %v319
    %v997 = vunpack.c.l.b16 %v320
    %v998 = vunpack.c.l.b16 %v321
    %v999 = vunpack.c.l.b16 %v322
    %v1000 = vunpack.c.l.b16 %v323
    %v1001 = vunpack.c.l.b16 %v324
    %v1002 = vunpack.c.l.b16 %v325
    %v1003 = vunpack.c.l.b16 %v326
    %v1004 = vunpack.c.l.b16 %v327
    %v1005 = vunpack.c.l.b16 %v328
    %v1006 = vunpack.c.l.b16 %v329
    %v1007 = vunpack.c.l.b16 %v330
    %v1008 = vunpack.c.l.b16 %v331
    %v1009 = vunpack.c.l.b16 %v332
    %v1010 = vunpack.c.l.b16 %v333
    %v1011 = vunpack.c.l.b16 %v334
    %v1012 = vunpack.c.l.b16 %v335
    %v1013 = vunpack.c.l.b16 %v336
    %v1014 = vunpack.c.l.b16 %v337
    %v1015 = vunpack.c.l.b16 %v338
    %v1016 = vunpack.c.l.b16 %v339
    %v1017 = vunpack.c.l.b16 %v340
    %v1018 = vunpack.c.l.b16 %v341
    %v1019 = vunpack.c.l.b16 %v342
    %v1020 = vunpack.c.l.b16 %v343
    %v1021 = vunpack.c.l.b16 %v344
    %v1022 = vunpack.c.l.b16 %v345
    %v1023 = vunpack.c.l.b16 %v346
    %v1024 = vunpack.c.l.b16 %v347
    %v1025 = vunpack.c.l.b16 %v348
    %v1026 = vunpack.c.l.b16 %v349
    %v1027 = vunpack.c.l.b16 %v350
    %v1028 = vunpack.c.l.b16 %v351
    %v1029 = vunpack.c.l.b16 %v352
    %v1030 = vunpack.c.l.b16 %v353
    %v1031 = vunpack.c.l.b16 %v354
    %v1032 = vunpack.c.l.b16 %v355
    %v1033 = vunpack.c.l.b16 %v356
    %v1034 = vunpack.c.l.b16 %v357
    %v1035 = vunpack.c.l.b16 %v358
    %v1036 = vunpack.c.l.b16 %v359
    %v1037 = vunpack.c.l.b16 %v360
    %v1038 = vunpack.c.l.b16 %v361
    %v1039 = vunpack.c.l.b16 %v362
    %v1040 = vunpack.c.l.b16 %v363
    %v1041 = vunpack.c.l.b16 %v364
    %v1042 = vunpack.c.l.b16 %v365
    %v1043 = vunpack.c.l.b16 %v366
    %v1044 = vunpack.c.l.b16 %v367
    %v1045 = vunpack.c.l.b16 %v368
    %v1046 = vunpack.c.l.b16 %v369
    %v1047 = vunpack.c.l.b16 %v370
    %v1048 = vunpack.c.l.b16 %v371
    %v1049 = vunpack.c.l.b16 %v372
    %v1050 = vunpack.c.l.b16 %v373
    %v1051 = vunpack.c.l.b16 %v374
    %v1052 = vunpack.c.l.b16 %v375
    %v1053 = vunpack.c.l.b16 %v376
    %v1054 = vunpack.c.l.b16 %v377
    %v1055 = vunpack.c.l.b16 %v378
    %v1056 = vunpack.c.l.b16 %v379
    %v1057 = vunpack.c.l.b16 %v380
    %v1058 = vunpack.c.l.b16 %v381
    %v1059 = vunpack.c.l.b16 %v382
    %v1060 = vunpack.c.l.b16 %v383
    %v1061 = vunpack.c.l.b16 %v384
    %v1062 = vunpack.c.l.b16 %v385
    %v1063 = vunpack.c.l.b16 %v386
    %v1064 = vunpack.c.l.b16 %v387
    %v1065 = vunpack.c.l.b16 %v388
    %v1066 = vunpack.c.l.b16 %v389
    %v1067 = vunpack.c.l.b16 %v390
    %v1068 = vunpack.c.l.b16 %v391
    %v1069 = vunpack.c.l.b16 %v392
    %v1070 = vunpack.c.l.b16 %v393
    %v1071 = vunpack.c.l.b16 %v394
    %v1072 = vunpack.c.l.b16 %v395
    %v1073 = vunpack.c.l.b16 %v396
    %v1074 = vunpack.c.l.b16 %v397
    %v1075 = vunpack.c.l.b16 %v398
    %v1076 = vunpack.c.l.b16 %v399
    %v1077 = vunpack.c.l.b16 %v400
    %v1078 = vunpack.c.l.b16 %v401
    %v1079 = vunpack.c.l.b16 %v402
    %v1080 = vunpack.c.l.b16 %v403
    %v1081 = vunpack.c.l.b16 %v404
    %v1082 = vunpack.c.l.b16 %v405
    %v1083 = vunpack.c.l.b16 %v406
    %v1084 = vunpack.c.l.b16 %v407
    %v1085 = vunpack.c.l.b16 %v408
    %v1086 = vunpack.c.l.b16 %v409
    %v1087 = vunpack.c.l.b16 %v410
    %v1088 = vunpack.c.l.b16 %v411
    %v1089 = vunpack.c.l.b16 %v412
    %v1090 = vunpack.c.l.b16 %v413
    %v1091 = vunpack.c.l.b16 %v414
    %v1092 = vunpack.c.l.b16 %v415
    %v1093 = vunpack.c.l.b16 %v416
    %v1094 = vunpack.c.l.b16 %v417
    %v1095 = vunpack.c.l.b16 %v418
    %v1096 = vunpack.c.l.b16 %v419
    %v1097 = vunpack.c.l.b16 %v420
    %v1098 = vunpack.c.l.b16 %v421
    %v1099 = vunpack.c.l.b16 %v422
    %v1100 = vunpack.c.l.b16 %v423
    %v1101 = vunpack.c.l.b16 %v424
    %v1102 = vunpack.c.l.b16 %v425
    %v1103 = vunpack.c.l.b16 %v426
    %v1104 = vunpack.c.l.b16 %v427
    %v1105 = vunpack.c.l.b16 %v428
    %v1106 = vunpack.c.l.b16 %v429
    %v1107 = vunpack.c.l.b16 %v430
    %v1108 = vunpack.c.l.b16 %v431
    %v1109 = vunpack.c.l.b16 %v432
    %v1110 = vunpack.c.l.b16 %v433
    %v1111 = vunpack.c.l.b16 %v434
    %v1112 = vpack.c.b16 %v809, %v808
    %v1113 = vpack.c.b16 %v811, %v810
    %v1114 = vpack.c.b16 %v813, %v812
    %v1115 = vpack.c.b16 %v815, %v814
    %v1116 = vpack.c.b16 %v817, %v816
    %v1117 = vpack.c.b16 %v819, %v818
    %v1118 = vpack.c.b16 %v821, %v820
    %v1119 = vpack.c.b16 %v823, %v822
    %v1120 = vpack.c.b16 %v825, %v824
    %v1121 = vpack.c.b16 %v827, %v826
    %v1122 = vpack.c.b16 %v829, %v828
    %v1123 = vpack.c.b16 %v831, %v830
    %v1124 = vpack.c.b16 %v833, %v832
    %v1125 = vpack.c.b16 %v835, %v834
    %v1126 = vpack.c.b16 %v837, %v836
    %v1127 = vpack.c.b16 %v839, %v838
    %v1128 = vpack.c.b16 %v841, %v840
    %v1129 = vpack.c.b16 %v843, %v842
    %v1130 = vpack.c.b16 %v845, %v844
    %v1131 = vpack.c.b16 %v847, %v846
    %v1132 = vpack.c.b16 %v849, %v848
    %v1133 = vpack.c.b16 %v851, %v850
    %v1134 = vpack.c.b16 %v853, %v852
    %v1135 = vpack.c.b16 %v855, %v854
    %v1136 = vpack.c.b16 %v857, %v856
    %v1137 = vpack.c.b16 %v859, %v858
    %v1138 = vpack.c.b16 %v861, %v860
    %v1139 = vpack.c.b16 %v863, %v862
    %v1140 = vpack.c.b16 %v865, %v864
    %v1141 = vpack.c.b16 %v867, %v866
    %v1142 = vpack.c.b16 %v869, %v868
    %v1143 = vpack.c.b16 %v871, %v870
    %v1144 = vpack.c.b16 %v873, %v872
    %v1145 = vpack.c.b16 %v875, %v874
    %v1146 = vpack.c.b16 %v877, %v876
    %v1147 = vpack.c.b16 %v879, %v878
    %v1148 = vpack.c.b16 %v881, %v880
    %v1149 = vpack.c.b16 %v883, %v882
    %v1150 = vpack.c.b16 %v885, %v884
    %v1151 = vpack.c.b16 %v887, %v886
    %v1152 = vpack.c.b16 %v889, %v888
    %v1153 = vpack.c.b16 %v891, %v890
    %v1154 = vpack.c.b16 %v893, %v892
    %v1155 = vpack.c.b16 %v895, %v894
    %v1156 = vpack.c.b16 %v897, %v896
    %v1157 = vpack.c.b16 %v899, %v898
    %v1158 = vpack.c.b16 %v901, %v900
    %v1159 = vpack.c.b16 %v903, %v902
    %v1160 = vpack.c.b16 %v905, %v904
    %v1161 = vpack.c.b16 %v907, %v906
    %v1162 = vpack.c.b16 %v909, %v908
    %v1163 = vpack.c.b16 %v911, %v910
    %v1164 = vpack.c.b16 %v913, %v912
    %v1165 = vpack.c.b16 %v915, %v914
    %v1166 = vpack.c.b16 %v917, %v916
    %v1167 = vpack.c.b16 %v919, %v918
    %v1168 = vpack.c.b16 %v921, %v920
    %v1169 = vpack.c.b16 %v923, %v922
    %v1170 = vpack.c.b16 %v925, %v924
    %v1171 = vpack.c.b16 %v927, %v926
    %v1172 = vpack.c.b16 %v929, %v928
    %v1173 = vpack.c.b16 %v931, %v930
    %v1174 = vpack.c.b16 %v933, %v932
    %v1175 = vpack.c.b16 %v935, %v934
    %v1176 = vpack.c.b16 %v937, %v936
    %v1177 = vpack.c.b16 %v939, %v938
    %v1178 = vpack.c.b16 %v941, %v940
    %v1179 = vpack.c.b16 %v943, %v942
    %v1180 = vpack.c.b16 %v945, %v944
    %v1181 = vpack.c.b16 %v947, %v946
    %v1182 = vpack.c.b16 %v949, %v948
    %v1183 = vpack.c.b16 %v951, %v950
    %v1184 = vpack.c.b16 %v953, %v952
    %v1185 = vpack.c.b16 %v955, %v954
    %v1186 = vpack.c.b16 %v957, %v956
    %v1187 = vpack.c.b16 %v959, %v958
    %v1188 = vpack.c.b16 %v961, %v960
    %v1189 = vpack.c.b16 %v963, %v962
    %v1190 = vpack.c.b16 %v965, %v964
    %v1191 = vpack.c.b16 %v967, %v966
    %v1192 = vpack.c.b16 %v969, %v968
    %v1193 = vpack.c.b16 %v971, %v970
    %v1194 = vpack.c.b16 %v973, %v972
    %v1195 = vpack.c.b16 %v975, %v974
    %v1196 = vpack.c.b16 %v977, %v976
    %v1197 = vpack.c.b16 %v979, %v978
    %v1198 = vpack.c.b16 %v981, %v980
    %v1199 = vpack.c.b16 %v983, %v982
    %v1200 = vpack.c.b16 %v985, %v984
    %v1201 = vpack.c.b16 %v987, %v986
    %v1202 = vpack.c.b16 %v989, %v988
    %v1203 = vpack.c.b16 %v991, %v990
    %v1204 = vpack.c.b16 %v993, %v992
    %v1205 = vpack.c.b16 %v995, %v994
    %v1206 = vpack.c.b16 %v997, %v996
    %v1207 = vpack.c.b16 %v999, %v998
    %v1208 = vpack.c.b16 %v1001, %v1000
    %v1209 = vpack.c.b16 %v1003, %v1002
    %v1210 = vpack.c.b16 %v1005, %v1004
    %v1211 = vpack.c.b16 %v1007, %v1006
    %v1212 = vpack.c.b16 %v1009, %v1008
    %v1213 = vpack.c.b16 %v1011, %v1010
    %v1214 = vpack.c.b16 %v1013, %v1012
    %v1215 = vpack.c.b16 %v1015, %v1014
    %v1216 = vpack.c.b16 %v1017, %v1016
    %v1217 = vpack.c.b16 %v1019, %v1018
    %v1218 = vpack.c.b16 %v1021, %v1020
    %v1219 = vpack.c.b16 %v1023, %v1022
    %v1220 = vpack.c.b16 %v1025, %v1024
    %v1221 = vpack.c.b16 %v1027, %v1026
    %v1222 = vpack.c.b16 %v1029, %v1028
    %v1223 = vpack.c.b16 %v1031, %v1030
    %v1224 = vpack.c.b16 %v1033, %v1032
    %v1225 = vpack.c.b16 %v1035, %v1034
    %v1226 = vpack.c.b16 %v1037, %v1036
    %v1227 = vpack.c.b16 %v1039, %v1038
    %v1228 = vpack.c.b16 %v1041, %v1040
    %v1229 = vpack.c.b16 %v1043, %v1042
    %v1230 = vpack.c.b16 %v1045, %v1044
    %v1231 = vpack.c.b16 %v1047, %v1046
    %v1232 = vpack.c.b16 %v1049, %v1048
    %v1233 = vpack.c.b16 %v1051, %v1050
    %v1234 = vpack.c.b16 %v1053, %v1052
    %v1235 = vpack.c.b16 %v1055, %v1054
    %v1236 = vpack.c.b16 %v1057, %v1056
    %v1237 = vpack.c.b16 %v1059, %v1058
    %v1238 = vpack.c.b16 %v1061, %v1060
    %v1239 = vpack.c.b16 %v1063, %v1062
    %v1240 = vpack.c.b16 %v1065, %v1064
    %v1241 = vpack.c.b16 %v1067, %v1066
    %v1242 = vpack.c.b16 %v1069, %v1068
    %v1243 = vpack.c.b16 %v1071, %v1070
    %v1244 = vpack.c.b16 %v1073, %v1072
    %v1245 = vpack.c.b16 %v1075, %v1074
    %v1246 = vpack.c.b16 %v1077, %v1076
    %v1247 = vpack.c.b16 %v1079, %v1078
    %v1248 = vpack.c.b16 %v1081, %v1080
    %v1249 = vpack.c.b16 %v1083, %v1082
    %v1250 = vpack.c.b16 %v1085, %v1084
    %v1251 = vpack.c.b16 %v1087, %v1086
    %v1252 = vpack.c.b16 %v1089, %v1088
    %v1253 = vpack.c.b16 %v1091, %v1090
    %v1254 = vpack.c.b16 %v1093, %v1092
    %v1255 = vpack.c.b16 %v1095, %v1094
    %v1256 = vpack.c.b16 %v1097, %v1096
    %v1257 = vpack.c.b16 %v1099, %v1098
    %v1258 = vpack.c.b16 %v1101, %v1100
    %v1259 = vpack.c.b16 %v1103, %v1102
    %v1260 = vpack.c.b16 %v1105, %v1104
    %v1261 = vpack.c.b16 %v1107, %v1106
    %v1262 = vpack.c.b16 %v1109, %v1108
    %v1263 = vpack.c.b16 %v1111, %v1110
    %1416 = vmatpush.bf16.msra.mxu0 %v1119
    %1417 = vmatpush.bf16.msra.mxu0 %v1118
    %1418 = vmatpush.bf16.msra.mxu0 %v1117
    %1419 = vmatpush.bf16.msra.mxu0 %v1116
    %1420 = vmatpush.bf16.msra.mxu0 %v1115
    %1421 = vmatpush.bf16.msra.mxu0 %v1114
    %1422 = vmatpush.bf16.msra.mxu0 %v1113
    %1423 = vmatpush.bf16.msra.mxu0 %v1112
    %1424 = vmatmul.bf16.gmra.mxu0 %v466
    %v1425 = vpop.f32.mrf.mxu0
    %v1426 = vadd.f32 %v436, %v1425
    %v1427 = vpop.f32.mrf.mxu0
    %1428 = vdwg.mxu0
    %1429 = vmatpush.bf16.msra.mxu0 %v1127
    %1430 = vmatpush.bf16.msra.mxu0 %v1126
    %1431 = vmatpush.bf16.msra.mxu0 %v1125
    %1432 = vmatpush.bf16.msra.mxu0 %v1124
    %1433 = vmatpush.bf16.msra.mxu0 %v1123
    %1434 = vmatpush.bf16.msra.mxu0 %v1122
    %1435 = vmatpush.bf16.msra.mxu0 %v1121
    %1436 = vmatpush.bf16.msra.mxu0 %v1120
    %1437 = vmatmul.bf16.gmra.mxu0 %v467
    %v1438 = vpop.f32.mrf.mxu0
    %v1439 = vadd.f32 %v1426, %v1438
    %v1440 = vpop.f32.mrf.mxu0
    %1441 = vdwg.mxu0
    %1442 = vmatpush.bf16.msra.mxu0 %v1135
    %1443 = vmatpush.bf16.msra.mxu0 %v1134
    %1444 = vmatpush.bf16.msra.mxu0 %v1133
    %1445 = vmatpush.bf16.msra.mxu0 %v1132
    %1446 = vmatpush.bf16.msra.mxu0 %v1131
    %1447 = vmatpush.bf16.msra.mxu0 %v1130
    %1448 = vmatpush.bf16.msra.mxu0 %v1129
    %1449 = vmatpush.bf16.msra.mxu0 %v1128
    %1450 = vmatmul.bf16.gmra.mxu0 %v468
    %v1451 = vpop.f32.mrf.mxu0
    %v1452 = vadd.f32 %v1439, %v1451
    %v1453 = vpop.f32.mrf.mxu0
    %1454 = vdwg.mxu0
    %1455 = vmatpush.bf16.msra.mxu0 %v1143
    %1456 = vmatpush.bf16.msra.mxu0 %v1142
    %1457 = vmatpush.bf16.msra.mxu0 %v1141
    %1458 = vmatpush.bf16.msra.mxu0 %v1140
    %1459 = vmatpush.bf16.msra.mxu0 %v1139
    %1460 = vmatpush.bf16.msra.mxu0 %v1138
    %1461 = vmatpush.bf16.msra.mxu0 %v1137
    %1462 = vmatpush.bf16.msra.mxu0 %v1136
    %1463 = vmatmul.bf16.gmra.mxu0 %v469
    %v1464 = vpop.f32.mrf.mxu0
    %v1465 = vadd.f32 %v1452, %v1464
    %v1466 = vpop.f32.mrf.mxu0
    %1467 = vdwg.mxu0
    %1468 = vmatpush.bf16.msra.mxu0 %v1151
    %1469 = vmatpush.bf16.msra.mxu0 %v1150
    %1470 = vmatpush.bf16.msra.mxu0 %v1149
    %1471 = vmatpush.bf16.msra.mxu0 %v1148
    %1472 = vmatpush.bf16.msra.mxu0 %v1147
    %1473 = vmatpush.bf16.msra.mxu0 %v1146
    %1474 = vmatpush.bf16.msra.mxu0 %v1145
    %1475 = vmatpush.bf16.msra.mxu0 %v1144
    %1476 = vmatmul.bf16.gmra.mxu0 %v470
    %v1477 = vpop.f32.mrf.mxu0
    %v1478 = vadd.f32 %v1465, %v1477
    %v1479 = vpop.f32.mrf.mxu0
    %1480 = vdwg.mxu0
    %1481 = vmatpush.bf16.msra.mxu0 %v1159
    %1482 = vmatpush.bf16.msra.mxu0 %v1158
    %1483 = vmatpush.bf16.msra.mxu0 %v1157
    %1484 = vmatpush.bf16.msra.mxu0 %v1156
    %1485 = vmatpush.bf16.msra.mxu0 %v1155
    %1486 = vmatpush.bf16.msra.mxu0 %v1154
    %1487 = vmatpush.bf16.msra.mxu0 %v1153
    %1488 = vmatpush.bf16.msra.mxu0 %v1152
    %1489 = vmatmul.bf16.gmra.mxu0 %v471
    %v1490 = vpop.f32.mrf.mxu0
    %v1491 = vadd.f32 %v1478, %v1490
    %v1492 = vpop.f32.mrf.mxu0
    %1493 = vdwg.mxu0
    %1494 = vmatpush.bf16.msra.mxu0 %v1167
    %1495 = vmatpush.bf16.msra.mxu0 %v1166
    %1496 = vmatpush.bf16.msra.mxu0 %v1165
    %1497 = vmatpush.bf16.msra.mxu0 %v1164
    %1498 = vmatpush.bf16.msra.mxu0 %v1163
    %1499 = vmatpush.bf16.msra.mxu0 %v1162
    %1500 = vmatpush.bf16.msra.mxu0 %v1161
    %1501 = vmatpush.bf16.msra.mxu0 %v1160
    %1502 = vmatmul.bf16.gmra.mxu0 %v472
    %v1503 = vpop.f32.mrf.mxu0
    %v1504 = vadd.f32 %v1491, %v1503
    %v1505 = vpop.f32.mrf.mxu0
    %1506 = vdwg.mxu0
    %1507 = vmatpush.bf16.msra.mxu0 %v1175
    %1508 = vmatpush.bf16.msra.mxu0 %v1174
    %1509 = vmatpush.bf16.msra.mxu0 %v1173
    %1510 = vmatpush.bf16.msra.mxu0 %v1172
    %1511 = vmatpush.bf16.msra.mxu0 %v1171
    %1512 = vmatpush.bf16.msra.mxu0 %v1170
    %1513 = vmatpush.bf16.msra.mxu0 %v1169
    %1514 = vmatpush.bf16.msra.mxu0 %v1168
    %1515 = vmatmul.bf16.gmra.mxu0 %v473
    %v1516 = vpop.f32.mrf.mxu0
    %v1517 = vadd.f32 %v1504, %v1516
    %v1518 = vpop.f32.mrf.mxu0
    %1519 = vdwg.mxu0
    %1520 = vmatpush.bf16.msra.mxu0 %v1183
    %1521 = vmatpush.bf16.msra.mxu0 %v1182
    %1522 = vmatpush.bf16.msra.mxu0 %v1181
    %1523 = vmatpush.bf16.msra.mxu0 %v1180
    %1524 = vmatpush.bf16.msra.mxu0 %v1179
    %1525 = vmatpush.bf16.msra.mxu0 %v1178
    %1526 = vmatpush.bf16.msra.mxu0 %v1177
    %1527 = vmatpush.bf16.msra.mxu0 %v1176
    %1528 = vmatmul.bf16.gmra.mxu0 %v474
    %v1529 = vpop.f32.mrf.mxu0
    %v1530 = vadd.f32 %v1517, %v1529
    %v1531 = vpop.f32.mrf.mxu0
    %1532 = vdwg.mxu0
    %1533 = vmatpush.bf16.msra.mxu0 %v1191
    %1534 = vmatpush.bf16.msra.mxu0 %v1190
    %1535 = vmatpush.bf16.msra.mxu0 %v1189
    %1536 = vmatpush.bf16.msra.mxu0 %v1188
    %1537 = vmatpush.bf16.msra.mxu0 %v1187
    %1538 = vmatpush.bf16.msra.mxu0 %v1186
    %1539 = vmatpush.bf16.msra.mxu0 %v1185
    %1540 = vmatpush.bf16.msra.mxu0 %v1184
    %1541 = vmatmul.bf16.gmra.mxu0 %v475
    %v1542 = vpop.f32.mrf.mxu0
    %v1543 = vadd.f32 %v1530, %v1542
    %v1544 = vpop.f32.mrf.mxu0
    %1545 = vdwg.mxu0
    %1546 = vmatpush.bf16.msra.mxu0 %v1199
    %1547 = vmatpush.bf16.msra.mxu0 %v1198
    %1548 = vmatpush.bf16.msra.mxu0 %v1197
    %1549 = vmatpush.bf16.msra.mxu0 %v1196
    %1550 = vmatpush.bf16.msra.mxu0 %v1195
    %1551 = vmatpush.bf16.msra.mxu0 %v1194
    %1552 = vmatpush.bf16.msra.mxu0 %v1193
    %1553 = vmatpush.bf16.msra.mxu0 %v1192
    %1554 = vmatmul.bf16.gmra.mxu0 %v476
    %v1555 = vpop.f32.mrf.mxu0
    %v1556 = vadd.f32 %v1543, %v1555
    %v1557 = vpop.f32.mrf.mxu0
    %1558 = vdwg.mxu0
    %1559 = vmatpush.bf16.msra.mxu0 %v1207
    %1560 = vmatpush.bf16.msra.mxu0 %v1206
    %1561 = vmatpush.bf16.msra.mxu0 %v1205
    %1562 = vmatpush.bf16.msra.mxu0 %v1204
    %1563 = vmatpush.bf16.msra.mxu0 %v1203
    %1564 = vmatpush.bf16.msra.mxu0 %v1202
    %1565 = vmatpush.bf16.msra.mxu0 %v1201
    %1566 = vmatpush.bf16.msra.mxu0 %v1200
    %1567 = vmatmul.bf16.gmra.mxu0 %v477
    %v1568 = vpop.f32.mrf.mxu0
    %v1569 = vadd.f32 %v1556, %v1568
    %v1570 = vpop.f32.mrf.mxu0
    %1571 = vdwg.mxu0
    %1572 = vmatpush.bf16.msra.mxu0 %v1215
    %1573 = vmatpush.bf16.msra.mxu0 %v1214
    %1574 = vmatpush.bf16.msra.mxu0 %v1213
    %1575 = vmatpush.bf16.msra.mxu0 %v1212
    %1576 = vmatpush.bf16.msra.mxu0 %v1211
    %1577 = vmatpush.bf16.msra.mxu0 %v1210
    %1578 = vmatpush.bf16.msra.mxu0 %v1209
    %1579 = vmatpush.bf16.msra.mxu0 %v1208
    %1580 = vmatmul.bf16.gmra.mxu0 %v478
    %v1581 = vpop.f32.mrf.mxu0
    %v1582 = vadd.f32 %v1569, %v1581
    %v1583 = vpop.f32.mrf.mxu0
    %1584 = vdwg.mxu0
    %1585 = vmatpush.bf16.msra.mxu0 %v1223
    %1586 = vmatpush.bf16.msra.mxu0 %v1222
    %1587 = vmatpush.bf16.msra.mxu0 %v1221
    %1588 = vmatpush.bf16.msra.mxu0 %v1220
    %1589 = vmatpush.bf16.msra.mxu0 %v1219
    %1590 = vmatpush.bf16.msra.mxu0 %v1218
    %1591 = vmatpush.bf16.msra.mxu0 %v1217
    %1592 = vmatpush.bf16.msra.mxu0 %v1216
    %1593 = vmatmul.bf16.gmra.mxu0 %v479
    %v1594 = vpop.f32.mrf.mxu0
    %v1595 = vadd.f32 %v1582, %v1594
    %v1596 = vpop.f32.mrf.mxu0
    %1597 = vdwg.mxu0
    %1598 = vmatpush.bf16.msra.mxu0 %v1231
    %1599 = vmatpush.bf16.msra.mxu0 %v1230
    %1600 = vmatpush.bf16.msra.mxu0 %v1229
    %1601 = vmatpush.bf16.msra.mxu0 %v1228
    %1602 = vmatpush.bf16.msra.mxu0 %v1227
    %1603 = vmatpush.bf16.msra.mxu0 %v1226
    %1604 = vmatpush.bf16.msra.mxu0 %v1225
    %1605 = vmatpush.bf16.msra.mxu0 %v1224
    %1606 = vmatmul.bf16.gmra.mxu0 %v480
    %v1607 = vpop.f32.mrf.mxu0
    %v1608 = vadd.f32 %v1595, %v1607
    %v1609 = vpop.f32.mrf.mxu0
    %1610 = vdwg.mxu0
    %1611 = vmatpush.bf16.msra.mxu0 %v1239
    %1612 = vmatpush.bf16.msra.mxu0 %v1238
    %1613 = vmatpush.bf16.msra.mxu0 %v1237
    %1614 = vmatpush.bf16.msra.mxu0 %v1236
    %1615 = vmatpush.bf16.msra.mxu0 %v1235
    %1616 = vmatpush.bf16.msra.mxu0 %v1234
    %1617 = vmatpush.bf16.msra.mxu0 %v1233
    %1618 = vmatpush.bf16.msra.mxu0 %v1232
    %1619 = vmatmul.bf16.gmra.mxu0 %v481
    %v1620 = vpop.f32.mrf.mxu0
    %v1621 = vadd.f32 %v1608, %v1620
    %v1622 = vpop.f32.mrf.mxu0
    %1623 = vdwg.mxu0
    %1624 = vmatpush.bf16.msra.mxu0 %v1247
    %1625 = vmatpush.bf16.msra.mxu0 %v1246
    %1626 = vmatpush.bf16.msra.mxu0 %v1245
    %1627 = vmatpush.bf16.msra.mxu0 %v1244
    %1628 = vmatpush.bf16.msra.mxu0 %v1243
    %1629 = vmatpush.bf16.msra.mxu0 %v1242
    %1630 = vmatpush.bf16.msra.mxu0 %v1241
    %1631 = vmatpush.bf16.msra.mxu0 %v1240
    %1632 = vmatmul.bf16.gmra.mxu0 %v482
    %v1633 = vpop.f32.mrf.mxu0
    %v1634 = vadd.f32 %v1621, %v1633
    %v1635 = vpop.f32.mrf.mxu0
    %1636 = vdwg.mxu0
    %1637 = vmatpush.bf16.msra.mxu0 %v1255
    %1638 = vmatpush.bf16.msra.mxu0 %v1254
    %1639 = vmatpush.bf16.msra.mxu0 %v1253
    %1640 = vmatpush.bf16.msra.mxu0 %v1252
    %1641 = vmatpush.bf16.msra.mxu0 %v1251
    %1642 = vmatpush.bf16.msra.mxu0 %v1250
    %1643 = vmatpush.bf16.msra.mxu0 %v1249
    %1644 = vmatpush.bf16.msra.mxu0 %v1248
    %1645 = vmatmul.bf16.gmra.mxu0 %v483
    %v1646 = vpop.f32.mrf.mxu0
    %v1647 = vadd.f32 %v1634, %v1646
    %v1648 = vpop.f32.mrf.mxu0
    %1649 = vdwg.mxu0
    %1650 = vmatpush.bf16.msra.mxu0 %v1263
    %1651 = vmatpush.bf16.msra.mxu0 %v1262
    %1652 = vmatpush.bf16.msra.mxu0 %v1261
    %1653 = vmatpush.bf16.msra.mxu0 %v1260
    %1654 = vmatpush.bf16.msra.mxu0 %v1259
    %1655 = vmatpush.bf16.msra.mxu0 %v1258
    %1656 = vmatpush.bf16.msra.mxu0 %v1257
    %1657 = vmatpush.bf16.msra.mxu0 %v1256
    %1658 = vmatmul.bf16.gmra.mxu0 %v484
    %v1659 = vpop.f32.mrf.mxu0
    %v1660 = vadd.f32 %v1647, %v1659
    %v1661 = vpop.f32.mrf.mxu0
    %1662 = vdwg.mxu0
    %v1663 = vmax.f32 %v1660, 0.0
    %v1664 = vld [vmem:[#allocation8 + $0x2] sm:$0x1]
    %v1665 = vperm.slane %v1664, 0
    %v1666 = vsub.f32 %v1663, %v1665
    %v1667 = vand.u32 2147483647, %v1666
    %vm1668 = vcmp.lt.f32.partialorder %v1667, 0.3
    %v1669 = vsel %vm1668, %v1666, 0.0
    %v1670 = vld [vmem:[#allocation8 + $0x1] sm:$0x1]
    %v1671 = vperm.slane %v1670, 0
    %v1672 = vmul.f32 %v1671, %v1669
    %v1673 = vsub.f32 %v1663, %v1672
    %v1674 = vpack.c.bf16 %v1673, %v1673
    %v1675 = vld [vmem:[#allocation7] sm:$0xf]
    %v1676 = vld [vmem:[#allocation7 + $0x4] sm:$0xf]
    %v1677 = vld [vmem:[#allocation7 + $0x8] sm:$0xf]
    %v1678 = vld [vmem:[#allocation7 + $0xc] sm:$0xf]
    %v1679 = vld [vmem:[#allocation7 + $0x10] sm:$0xf]
    %v1680 = vld [vmem:[#allocation7 + $0x14] sm:$0xf]
    %v1681 = vld [vmem:[#allocation7 + $0x18] sm:$0xf]
    %v1682 = vld [vmem:[#allocation7 + $0x1c] sm:$0xf]
    %v1683 = vld [vmem:[#allocation7 + $0x20] sm:$0xf]
    %v1684 = vld [vmem:[#allocation7 + $0x24] sm:$0xf]
    %v1685 = vld [vmem:[#allocation7 + $0x28] sm:$0xf]
    %v1686 = vld [vmem:[#allocation7 + $0x2c] sm:$0xf]
    %v1687 = vld [vmem:[#allocation7 + $0x30] sm:$0xf]
    %v1688 = vld [vmem:[#allocation7 + $0x34] sm:$0xf]
    %v1689 = vld [vmem:[#allocation7 + $0x38] sm:$0xf]
    %v1690 = vld [vmem:[#allocation7 + $0x3c] sm:$0xf]
    %v1691 = vld [vmem:[#allocation8 + $0x3] sm:$0x1]
    %v1692 = vperm.slane %v1691, 0
    %v1709 = vunpack.c.l.b16 %v1675
    %v1710 = vunpack.c.l.b16 %v1676
    %v1711 = vunpack.c.l.b16 %v1677
    %v1712 = vunpack.c.l.b16 %v1678
    %v1713 = vunpack.c.l.b16 %v1679
    %v1714 = vunpack.c.l.b16 %v1680
    %v1715 = vunpack.c.l.b16 %v1681
    %v1716 = vunpack.c.l.b16 %v1682
    %v1717 = vunpack.c.l.b16 %v1683
    %v1718 = vunpack.c.l.b16 %v1684
    %v1719 = vunpack.c.l.b16 %v1685
    %v1720 = vunpack.c.l.b16 %v1686
    %v1721 = vunpack.c.l.b16 %v1687
    %v1722 = vunpack.c.l.b16 %v1688
    %v1723 = vunpack.c.l.b16 %v1689
    %v1724 = vunpack.c.l.b16 %v1690
    %v1725 = vpack.c.b16 %v1710, %v1709
    %v1726 = vpack.c.b16 %v1712, %v1711
    %v1727 = vpack.c.b16 %v1714, %v1713
    %v1728 = vpack.c.b16 %v1716, %v1715
    %v1729 = vpack.c.b16 %v1718, %v1717
    %v1730 = vpack.c.b16 %v1720, %v1719
    %v1731 = vpack.c.b16 %v1722, %v1721
    %v1732 = vpack.c.b16 %v1724, %v1723
    %1741 = vmatpush.bf16.msra.mxu0 %v1732
    %1742 = vmatpush.bf16.msra.mxu0 %v1731
    %1743 = vmatpush.bf16.msra.mxu0 %v1730
    %1744 = vmatpush.bf16.msra.mxu0 %v1729
    %1745 = vmatpush.bf16.msra.mxu0 %v1728
    %1746 = vmatpush.bf16.msra.mxu0 %v1727
    %1747 = vmatpush.bf16.msra.mxu0 %v1726
    %1748 = vmatpush.bf16.msra.mxu0 %v1725
    %1749 = vmatmul.bf16.gmra.mxu0 %v1674
    %v1750 = vpop.f32.mrf.mxu0
    %v1751 = vadd.f32 %v1692, %v1750
    %v1752 = vpop.f32.mrf.mxu0
    %1753 = vdwg.mxu0
    %v1754 = vld [vmem:[#allocation8 + $0x7] sm:$0x1]
    %v1755 = vperm.slane %v1754, 0
    %v1756 = vsub.f32 %v1751, %v1755
    %v1757 = vand.u32 2147483647, %v1756
    %vm1758 = vcmp.lt.f32.partialorder %v1757, 0.25
    %v1759 = vsel %vm1758, %v1756, 0.0
    %v1760 = vld [vmem:[#allocation8 + $0x6] sm:$0x1]
    %v1761 = vperm.slane %v1760, 0
    %v1762 = vmul.f32 %v1761, %v1759
    %v1763 = vsub.f32 %v1751, %v1762
    %v1764 = vld [vmem:[#allocation8 + $0x4] sm:$0x1]
    %v1765 = vperm.slane %v1764, 0
    %v1766 = vmul.f32 %v1763, %v1765
    %v1767 = vld [vmem:[#allocation8 + $0x5] sm:$0x1]
    %v1768 = vperm.slane %v1767, 0
    %v1769 = vadd.f32 %v1766, %v1768
    %v1770 = vmax.f32 %v1769, 0.0
    %v1771 = vld [vmem:[#allocation8 + $0x9] sm:$0x1]
    %v1772 = vperm.slane %v1771, 0
    %v1773 = vsub.f32 %v1770, %v1772
    %v1774 = vand.u32 2147483647, %v1773
    %vm1775 = vcmp.lt.f32.partialorder %v1774, 0.2
    %v1776 = vsel %vm1775, %v1773, 0.0
    %v1777 = vld [vmem:[#allocation8 + $0x8] sm:$0x1]
    %v1778 = vperm.slane %v1777, 0
    %v1779 = vmul.f32 %v1778, %v1776
    %v1780 = vsub.f32 %v1770, %v1779
    %v1781 = vld [vmem:[#allocation8 + $0xb] sm:$0x1]
    %v1782 = vperm.slane %v1781, 0
    %v1783 = vsub.f32 %v1780, %v1782
    %v1784 = vand.u32 2147483647, %v1783
    %vm1785 = vcmp.lt.f32.partialorder %v1784, 0.35
    %v1786 = vsel %vm1785, %v1783, 0.0
    %v1787 = vld [vmem:[#allocation8 + $0xa] sm:$0x1]
    %v1788 = vperm.slane %v1787, 0
    %v1789 = vmul.f32 %v1788, %v1786
    %v1790 = vsub.f32 %v1780, %v1789
    %v1791 = vpack.c.bf16 %v1790, %v1790
    %s1792 = scalar_lea.vmem [#allocation7], 64
    %v1793 = vld [vmem:[%s1792] sm:$0xf]
    %v1794 = vld [vmem:[%s1792 + $0x4] sm:$0xf]
    %v1795 = vld [vmem:[%s1792 + $0x8] sm:$0xf]
    %v1796 = vld [vmem:[%s1792 + $0xc] sm:$0xf]
    %v1797 = vld [vmem:[%s1792 + $0x10] sm:$0xf]
    %v1798 = vld [vmem:[%s1792 + $0x14] sm:$0xf]
    %v1799 = vld [vmem:[%s1792 + $0x18] sm:$0xf]
    %v1800 = vld [vmem:[%s1792 + $0x1c] sm:$0xf]
    %v1801 = vld [vmem:[%s1792 + $0x20] sm:$0xf]
    %v1802 = vld [vmem:[%s1792 + $0x24] sm:$0xf]
    %v1803 = vld [vmem:[%s1792 + $0x28] sm:$0xf]
    %v1804 = vld [vmem:[%s1792 + $0x2c] sm:$0xf]
    %v1805 = vld [vmem:[%s1792 + $0x30] sm:$0xf]
    %v1806 = vld [vmem:[%s1792 + $0x34] sm:$0xf]
    %v1807 = vld [vmem:[%s1792 + $0x38] sm:$0xf]
    %v1808 = vld [vmem:[%s1792 + $0x3c] sm:$0xf]
    %v1809 = vld [vmem:[#allocation8 + $0xc] sm:$0x1]
    %v1810 = vperm.slane %v1809, 0
    %v1827 = vunpack.c.l.b16 %v1793
    %v1828 = vunpack.c.l.b16 %v1794
    %v1829 = vunpack.c.l.b16 %v1795
    %v1830 = vunpack.c.l.b16 %v1796
    %v1831 = vunpack.c.l.b16 %v1797
    %v1832 = vunpack.c.l.b16 %v1798
    %v1833 = vunpack.c.l.b16 %v1799
    %v1834 = vunpack.c.l.b16 %v1800
    %v1835 = vunpack.c.l.b16 %v1801
    %v1836 = vunpack.c.l.b16 %v1802
    %v1837 = vunpack.c.l.b16 %v1803
    %v1838 = vunpack.c.l.b16 %v1804
    %v1839 = vunpack.c.l.b16 %v1805
    %v1840 = vunpack.c.l.b16 %v1806
    %v1841 = vunpack.c.l.b16 %v1807
    %v1842 = vunpack.c.l.b16 %v1808
    %v1843 = vpack.c.b16 %v1828, %v1827
    %v1844 = vpack.c.b16 %v1830, %v1829
    %v1845 = vpack.c.b16 %v1832, %v1831
    %v1846 = vpack.c.b16 %v1834, %v1833
    %v1847 = vpack.c.b16 %v1836, %v1835
    %v1848 = vpack.c.b16 %v1838, %v1837
    %v1849 = vpack.c.b16 %v1840, %v1839
    %v1850 = vpack.c.b16 %v1842, %v1841
    %1859 = vmatpush.bf16.msra.mxu0 %v1850
    %1860 = vmatpush.bf16.msra.mxu0 %v1849
    %1861 = vmatpush.bf16.msra.mxu0 %v1848
    %1862 = vmatpush.bf16.msra.mxu0 %v1847
    %1863 = vmatpush.bf16.msra.mxu0 %v1846
    %1864 = vmatpush.bf16.msra.mxu0 %v1845
    %1865 = vmatpush.bf16.msra.mxu0 %v1844
    %1866 = vmatpush.bf16.msra.mxu0 %v1843
    %1867 = vmatmul.bf16.gmra.mxu0 %v1791
    %v1868 = vpop.f32.mrf.mxu0
    %v1869 = vadd.f32 %v1810, %v1868
    %v1870 = vpop.f32.mrf.mxu0
    %1871 = vdwg.mxu0
    %v1872 = vld [vmem:[#allocation8 + $0x10] sm:$0x1]
    %v1873 = vperm.slane %v1872, 0
    %v1874 = vsub.f32 %v1869, %v1873
    %v1875 = vand.u32 2147483647, %v1874
    %vm1876 = vcmp.lt.f32.partialorder %v1875, 0.4
    %v1877 = vsel %vm1876, %v1874, 0.0
    %v1878 = vld [vmem:[#allocation8 + $0xf] sm:$0x1]
    %v1879 = vperm.slane %v1878, 0
    %v1880 = vmul.f32 %v1879, %v1877
    %v1881 = vsub.f32 %v1869, %v1880
    %v1882 = vld [vmem:[#allocation8 + $0xd] sm:$0x1]
    %v1883 = vperm.slane %v1882, 0
    %v1884 = vmul.f32 %v1881, %v1883
    %v1885 = vld [vmem:[#allocation8 + $0xe] sm:$0x1]
    %v1886 = vperm.slane %v1885, 0
    %v1887 = vadd.f32 %v1884, %v1886
    %v1888 = vmax.f32 %v1887, 0.0
    %v1889 = vld [vmem:[#allocation8 + $0x12] sm:$0x1]
    %v1890 = vperm.slane %v1889, 0
    %v1891 = vsub.f32 %v1888, %v1890
    %v1892 = vand.u32 2147483647, %v1891
    %vm1893 = vcmp.lt.f32.partialorder %v1892, 0.15
    %v1894 = vsel %vm1893, %v1891, 0.0
    %v1895 = vld [vmem:[#allocation8 + $0x11] sm:$0x1]
    %v1896 = vperm.slane %v1895, 0
    %v1897 = vmul.f32 %v1896, %v1894
    %v1898 = vsub.f32 %v1888, %v1897
    %v1899 = vld [vmem:[#allocation8 + $0x14] sm:$0x1]
    %v1900 = vperm.slane %v1899, 0
    %v1901 = vsub.f32 %v1898, %v1900
    %v1902 = vand.u32 2147483647, %v1901
    %vm1903 = vcmp.lt.f32.partialorder %v1902, 0.3
    %v1904 = vsel %vm1903, %v1901, 0.0
    %v1905 = vld [vmem:[#allocation8 + $0x13] sm:$0x1]
    %v1906 = vperm.slane %v1905, 0
    %v1907 = vmul.f32 %v1906, %v1904
    %v1908 = vsub.f32 %v1898, %v1907
    %v1909 = vpack.c.bf16 %v1908, %v1908
    %s1910 = scalar_lea.vmem [#allocation7], 128
    %v1911 = vld [vmem:[%s1910] sm:$0xf]
    %v1912 = vld [vmem:[%s1910 + $0x4] sm:$0xf]
    %v1913 = vld [vmem:[%s1910 + $0x8] sm:$0xf]
    %v1914 = vld [vmem:[%s1910 + $0xc] sm:$0xf]
    %v1915 = vld [vmem:[%s1910 + $0x10] sm:$0xf]
    %v1916 = vld [vmem:[%s1910 + $0x14] sm:$0xf]
    %v1917 = vld [vmem:[%s1910 + $0x18] sm:$0xf]
    %v1918 = vld [vmem:[%s1910 + $0x1c] sm:$0xf]
    %v1919 = vld [vmem:[%s1910 + $0x20] sm:$0xf]
    %v1920 = vld [vmem:[%s1910 + $0x24] sm:$0xf]
    %v1921 = vld [vmem:[%s1910 + $0x28] sm:$0xf]
    %v1922 = vld [vmem:[%s1910 + $0x2c] sm:$0xf]
    %v1923 = vld [vmem:[%s1910 + $0x30] sm:$0xf]
    %v1924 = vld [vmem:[%s1910 + $0x34] sm:$0xf]
    %v1925 = vld [vmem:[%s1910 + $0x38] sm:$0xf]
    %v1926 = vld [vmem:[%s1910 + $0x3c] sm:$0xf]
    %v1927 = vld [vmem:[#allocation8 + $0x15] sm:$0x1]
    %v1928 = vperm.slane %v1927, 0
    %v1945 = vunpack.c.l.b16 %v1911
    %v1946 = vunpack.c.l.b16 %v1912
    %v1947 = vunpack.c.l.b16 %v1913
    %v1948 = vunpack.c.l.b16 %v1914
    %v1949 = vunpack.c.l.b16 %v1915
    %v1950 = vunpack.c.l.b16 %v1916
    %v1951 = vunpack.c.l.b16 %v1917
    %v1952 = vunpack.c.l.b16 %v1918
    %v1953 = vunpack.c.l.b16 %v1919
    %v1954 = vunpack.c.l.b16 %v1920
    %v1955 = vunpack.c.l.b16 %v1921
    %v1956 = vunpack.c.l.b16 %v1922
    %v1957 = vunpack.c.l.b16 %v1923
    %v1958 = vunpack.c.l.b16 %v1924
    %v1959 = vunpack.c.l.b16 %v1925
    %v1960 = vunpack.c.l.b16 %v1926
    %v1961 = vpack.c.b16 %v1946, %v1945
    %v1962 = vpack.c.b16 %v1948, %v1947
    %v1963 = vpack.c.b16 %v1950, %v1949
    %v1964 = vpack.c.b16 %v1952, %v1951
    %v1965 = vpack.c.b16 %v1954, %v1953
    %v1966 = vpack.c.b16 %v1956, %v1955
    %v1967 = vpack.c.b16 %v1958, %v1957
    %v1968 = vpack.c.b16 %v1960, %v1959
    %1977 = vmatpush.bf16.msra.mxu0 %v1968
    %1978 = vmatpush.bf16.msra.mxu0 %v1967
    %1979 = vmatpush.bf16.msra.mxu0 %v1966
    %1980 = vmatpush.bf16.msra.mxu0 %v1965
    %1981 = vmatpush.bf16.msra.mxu0 %v1964
    %1982 = vmatpush.bf16.msra.mxu0 %v1963
    %1983 = vmatpush.bf16.msra.mxu0 %v1962
    %1984 = vmatpush.bf16.msra.mxu0 %v1961
    %1985 = vmatmul.bf16.gmra.mxu0 %v1909
    %v1986 = vpop.f32.mrf.mxu0
    %v1987 = vadd.f32 %v1928, %v1986
    %v1988 = vpop.f32.mrf.mxu0
    %1989 = vdwg.mxu0
    %v1990 = vld [vmem:[#allocation8 + $0x19] sm:$0x1]
    %v1991 = vperm.slane %v1990, 0
    %v1992 = vsub.f32 %v1987, %v1991
    %v1993 = vand.u32 2147483647, %v1992
    %vm1994 = vcmp.lt.f32.partialorder %v1993, 0.25
    %v1995 = vsel %vm1994, %v1992, 0.0
    %v1996 = vld [vmem:[#allocation8 + $0x18] sm:$0x1]
    %v1997 = vperm.slane %v1996, 0
    %v1998 = vmul.f32 %v1997, %v1995
    %v1999 = vsub.f32 %v1987, %v1998
    %v2000 = vld [vmem:[#allocation8 + $0x16] sm:$0x1]
    %v2001 = vperm.slane %v2000, 0
    %v2002 = vmul.f32 %v1999, %v2001
    %v2003 = vld [vmem:[#allocation8 + $0x17] sm:$0x1]
    %v2004 = vperm.slane %v2003, 0
    %v2005 = vadd.f32 %v2002, %v2004
    %v2006 = vmax.f32 %v2005, 0.0
    %v2007 = vld [vmem:[#allocation8 + $0x1b] sm:$0x1]
    %v2008 = vperm.slane %v2007, 0
    %v2009 = vsub.f32 %v2006, %v2008
    %v2010 = vand.u32 2147483647, %v2009
    %vm2011 = vcmp.lt.f32.partialorder %v2010, 0.2
    %v2012 = vsel %vm2011, %v2009, 0.0
    %v2013 = vld [vmem:[#allocation8 + $0x1a] sm:$0x1]
    %v2014 = vperm.slane %v2013, 0
    %v2015 = vmul.f32 %v2014, %v2012
    %v2016 = vsub.f32 %v2006, %v2015
    %v2017 = vld [vmem:[#allocation8 + $0x1d] sm:$0x1]
    %v2018 = vperm.slane %v2017, 0
    %v2019 = vsub.f32 %v2016, %v2018
    %v2020 = vand.u32 2147483647, %v2019
    %vm2021 = vcmp.lt.f32.partialorder %v2020, 0.3
    %v2022 = vsel %vm2021, %v2019, 0.0
    %v2023 = vld [vmem:[#allocation8 + $0x1c] sm:$0x1]
    %v2024 = vperm.slane %v2023, 0
    %v2025 = vmul.f32 %v2024, %v2022
    %v2026 = vsub.f32 %v2016, %v2025
    %v2027 = vld [vmem:[#allocation8 + $0x1e] sm:$0x1]
    %v2028 = vperm.slane %v2027, 0
    %v2029 = vmul.f32 %v2026, %v2028
    %2030 = vadd.xlane.f32.xlu0 %v2029
    %v2031 = vpop.xlane.xlu0 %2030
    %v2032 = vld [vmem:[#allocation8 + $0x1f] sm:$0x1]
    %v2033 = vperm.slane %v2032, 0
    %v2034 = vadd.f32 %v2031, %v2033
    %v2035 = vxor.u32 %v2034, 2147483648
    %v2036 = vmul.f32 %v2035, 1.442695
    %v2037 = vpow.pop %v2036
    %v2038 = vadd.f32 %v2037, 1.0
    %v2039 = vrcp.pop %v2038
    %v2040 = vmul.f32 %v2038, %v2039
    %v2041 = vsub.f32 1.0, %v2040
    %v2042 = vmul.f32 %v2039, %v2041
    %v2043 = vadd.f32 %v2039, %v2042
    %vm2044 = vweird.f32 %v2038
    %vm2045 = vweird.f32 %v2039
    %vm2046 = vmor %vm2044, %vm2045
    %v2047 = vsel %vm2046, %v2039, %v2043
    %v2048 = vand.u32 2147483647, %v2038
    %vm2049 = vcmp.eq.f32.partialorder %v2048, 8.507059e+37
    %v2050 = vand.u32 %v2038, 2147483648
    %v2051 = vor.u32 1.1754944e-38, %v2050
    %v2052 = vsel %vm2049, %v2051, %v2047
    %v2053 = vmul.f32 1.0, %v2052
    %vm2054 = vcmask 7168
    %2055 = vst.msk [vmem:[%s4] sm:$0xff] %vm2054, %v2053
    // Predicated region
    $region34: #{tpu_custom_call.1} parent=1 // pred_check
      _
    $region35: #{tpu_custom_call.1} parent=1 // pred_check_branch
      %2057 = sbr.rel (0) target = $region37
    $region36: #{tpu_custom_call.1} parent=1 // pred_region
      _
    $region37: #{tpu_custom_call.1} parent=1 // pred_fallthru
      _
    // Predicated region
    $region38: #{tpu_custom_call.1} parent=1 // pred_check
      _
    $region39: #{tpu_custom_call.1} parent=1 // pred_check_branch
      %2059 = sbr.rel (0) target = $region41
    $region40: #{tpu_custom_call.1} parent=1 // pred_region
      _
    $region41: #{tpu_custom_call.1} parent=1 // pred_fallthru
      _
    %2060 = vsyncpa [#allocation4], 1
    %2061 = vsyncpa [#allocation6], 1
    %2062 = vsyncpa [#allocation9], 1

</llo_original>
